<compile_context>
chip_gen: v7x
topology: tpu7x:2x2x1
jax: 0.10.0
libtpu: 0.0.40
codegen_flags: <defaults>
</compile_context>

<pallas_src>
import jax
import jax.numpy as jnp
import numpy as np
from jax import lax
from jax.experimental import pallas as pl
from jax.experimental.pallas import tpu as pltpu


def lstm_net_kernel(ids_ref, emb_ref, w_ih_ref, w_hh_ref, bias_ref, w_fc_ref,
                    out_ref, x_ref, preact_ref):
    """Fused LSTMNet forward.

    ids_ref:    (B, T)     int32  SMEM (scalar prefetch) -- token ids
    emb_ref:    (V, E)     f32    VMEM -- embedding table
    w_ih_ref:   (E, 4H)    f32    VMEM -- input weights, gate order [i, f, g, o]
    w_hh_ref:   (H, 4H)    f32    VMEM -- recurrent weights
    bias_ref:   (1, 4H)    f32    VMEM -- folded b_ih + b_hh
    w_fc_ref:   (H, O)     f32    VMEM -- FC weights (no bias)
    out_ref:    (B, O)     f32    VMEM -- logits (dense_outputs)
    x_ref:      (T*B, E)   f32    VMEM scratch -- gathered embeddings (time-major)
    preact_ref: (T*B, 4H)  f32    VMEM scratch -- x @ W_ih + bias for all steps
    """
    B, T = ids_ref.shape
    H = w_hh_ref.shape[0]

    # ---- Embedding gather: T*B dynamic-row reads from the VMEM-resident table,
    #      written time-major so the preact slab is lane/sublane dense. ----
    for t in range(T):
        for b in range(B):
            idx = ids_ref[b, t]
            x_ref[pl.ds(t * B + b, 1), :] = emb_ref[pl.ds(idx, 1), :]

    # ---- Hoisted input projection + bias for ALL time steps: one (T*B,E)@(E,4H)
    #      matmul instead of T tiny matmuls inside the recurrence. ----
    preact_ref[...] = (jnp.dot(x_ref[...], w_ih_ref[...],
                               preferred_element_type=jnp.float32)
                       + bias_ref[...])

    w_hh = w_hh_ref[...]

    def step(t, carry):
        h, c = carry
        # Serial critical path: one (B,H)@(H,4H) matmul + gate elementwise math.
        pa = preact_ref[pl.ds(pl.multiple_of(t * B, B), B), :]
        gates = pa + jnp.dot(h, w_hh, preferred_element_type=jnp.float32)
        # PyTorch gate order [i, f, g, o].
        # TODO(synk): full-width activation + lane-mask + pltpu.roll would avoid these
        # 32-lane sub-slices; skipped (review calls it low priority) for clarity.
        i_g = jax.nn.sigmoid(gates[:, 0 * H:1 * H])
        f_g = jax.nn.sigmoid(gates[:, 1 * H:2 * H])
        g_g = jnp.tanh(gates[:, 2 * H:3 * H])
        o_g = jax.nn.sigmoid(gates[:, 3 * H:4 * H])
        c_new = f_g * c + i_g * g_g
        h_new = o_g * jnp.tanh(c_new)
        return h_new, c_new

    h0 = jnp.zeros((B, H), jnp.float32)
    c0 = jnp.zeros((B, H), jnp.float32)
    h_final, _ = lax.fori_loop(0, T, step, (h0, c0), unroll=True)

    # ---- Final FC (no bias) fused in-kernel; logits written directly. ----
    out_ref[...] = jnp.dot(h_final, w_fc_ref[...],
                           preferred_element_type=jnp.float32)


def lstm_net_forward(text, emb_table, w_ih, w_hh, bias, w_fc):
    """text: (B, T) int32 token ids. Returns (B, O) float32 logits (dense_outputs)."""
    B, T = text.shape
    V, E = emb_table.shape
    H = w_hh.shape[0]
    O = w_fc.shape[1]
    bias2d = bias.reshape(1, 4 * H).astype(jnp.float32)

    grid_spec = pltpu.PrefetchScalarGridSpec(
        num_scalar_prefetch=1,          # token ids -> SMEM
        grid=(1,),                      # single program: everything resident in VMEM
        in_specs=[
            pl.BlockSpec((V, E), lambda i, ids: (0, 0)),        # embedding table
            pl.BlockSpec((E, 4 * H), lambda i, ids: (0, 0)),    # W_ih
            pl.BlockSpec((H, 4 * H), lambda i, ids: (0, 0)),    # W_hh
            pl.BlockSpec((1, 4 * H), lambda i, ids: (0, 0)),    # bias (b_ih + b_hh)
            pl.BlockSpec((H, O), lambda i, ids: (0, 0)),        # W_fc
        ],
        out_specs=pl.BlockSpec((B, O), lambda i, ids: (0, 0)),
        scratch_shapes=[
            pltpu.VMEM((T * B, E), jnp.float32),       # gathered embeddings
            pltpu.VMEM((T * B, 4 * H), jnp.float32),   # pre-activations (dense slab)
        ],
    )

    return pl.pallas_call(
        lstm_net_kernel,
        out_shape=jax.ShapeDtypeStruct((B, O), jnp.float32),
        grid_spec=grid_spec,
        compiler_params=pltpu.CompilerParams(
            dimension_semantics=("arbitrary",)),
    )(text, emb_table.astype(jnp.float32), w_ih.astype(jnp.float32),
      w_hh.astype(jnp.float32), bias2d, w_fc.astype(jnp.float32))


def _reference_forward(text, emb_table, w_ih, w_hh, bias, w_fc):
    """Pure-JAX f32 reference mirroring torch semantics (n_layers=1, unidirectional)."""
    embedded = jnp.take(emb_table, text, axis=0)   # (B, T, E)
    B, T, _ = embedded.shape
    H = w_hh.shape[0]
    h = jnp.zeros((B, H), jnp.float32)
    c = jnp.zeros((B, H), jnp.float32)
    for t in range(T):
        gates = (jnp.dot(embedded[:, t, :], w_ih)
                 + jnp.dot(h, w_hh)
                 + bias[None, :])
        i_g = jax.nn.sigmoid(gates[:, 0 * H:1 * H])
        f_g = jax.nn.sigmoid(gates[:, 1 * H:2 * H])
        g_g = jnp.tanh(gates[:, 2 * H:3 * H])
        o_g = jax.nn.sigmoid(gates[:, 3 * H:4 * H])
        c = f_g * c + i_g * g_g
        h = o_g * jnp.tanh(c)
    return jnp.dot(h, w_fc)


if __name__ == "__main__":
    # Module hyperparameters (single layer, unidirectional).
    # TODO(synk): n_layers>1 / bidirectional variants not implemented; dropout is a
    # no-op at n_layers=1, self.sigmoid and text_lengths are unused in forward().
    vocab_size = 50
    embedding_dim = 32
    hidden_dim = 32
    output_dim = 4

    B, T = 2, 8

    key = jax.random.PRNGKey(0)
    k_tok, k_emb, k_ih, k_hh, k_bih, k_bhh, k_fc = jax.random.split(key, 7)

    scale = 1.0 / np.sqrt(hidden_dim)
    text = jax.random.randint(k_tok, (B, T), 0, vocab_size, dtype=jnp.int32)
    emb_table = jax.random.normal(k_emb, (vocab_size, embedding_dim), jnp.float32) * 0.1
    # PyTorch stores weight_ih as (4H, E); we keep the transposed (E, 4H) layout
    # with gate order [i, f, g, o], and fold b_ih + b_hh into one bias vector.
    w_ih = jax.random.uniform(k_ih, (embedding_dim, 4 * hidden_dim), jnp.float32,
                              -scale, scale)
    w_hh = jax.random.uniform(k_hh, (hidden_dim, 4 * hidden_dim), jnp.float32,
                              -scale, scale)
    bias = (jax.random.uniform(k_bih, (4 * hidden_dim,), jnp.float32, -scale, scale)
            + jax.random.uniform(k_bhh, (4 * hidden_dim,), jnp.float32, -scale, scale))
    w_fc = jax.random.uniform(k_fc, (hidden_dim, output_dim), jnp.float32, -scale, scale)

    out = jax.block_until_ready(
        lstm_net_forward(text, emb_table, w_ih, w_hh, bias, w_fc))

    ref = _reference_forward(text, emb_table, w_ih, w_hh, bias, w_fc)
    np.testing.assert_allclose(np.asarray(out), np.asarray(ref),
                               atol=1e-3, rtol=1e-3)

    print("KERNEL_OK")
</pallas_src>

<mosaic_0001>
module attributes {stable_mosaic.version = 11 : i64} {
  func.func @lstm_net_kernel(%arg0: i32, %arg1: memref<2x8xi32, #tpu.memory_space<smem>>, %arg2: memref<50x32xf32, #tpu.memory_space<vmem>>, %arg3: memref<32x128xf32, #tpu.memory_space<vmem>>, %arg4: memref<32x128xf32, #tpu.memory_space<vmem>>, %arg5: memref<1x128xf32, #tpu.memory_space<vmem>>, %arg6: memref<32x4xf32, #tpu.memory_space<vmem>>, %arg7: memref<2x4xf32, #tpu.memory_space<vmem>>, %arg8: memref<16x32xf32, #tpu.memory_space<vmem>>, %arg9: memref<16x128xf32, #tpu.memory_space<vmem>>) attributes {dimension_semantics = [#tpu.dimension_semantics<arbitrary>], iteration_bounds = array<i64: 1>, scalar_prefetch = 1 : i64, scratch_operands = 2 : i64, tpu.core_type = #tpu.core_type<tc>, window_params = [{pipeline_mode = #tpu.pipeline_mode<synchronous>, transform_indices = @transform_0, window_bounds = array<i64: 50, 32>}, {pipeline_mode = #tpu.pipeline_mode<synchronous>, transform_indices = @transform_1, window_bounds = array<i64: 32, 128>}, {pipeline_mode = #tpu.pipeline_mode<synchronous>, transform_indices = @transform_2, window_bounds = array<i64: 32, 128>}, {pipeline_mode = #tpu.pipeline_mode<synchronous>, transform_indices = @transform_3, window_bounds = array<i64: 1, 128>}, {pipeline_mode = #tpu.pipeline_mode<synchronous>, transform_indices = @transform_4, window_bounds = array<i64: 32, 4>}, {pipeline_mode = #tpu.pipeline_mode<synchronous>, transform_indices = @transform_5, window_bounds = array<i64: 2, 4>}]} {
    %c0 = arith.constant 0 : index
    %c0_0 = arith.constant 0 : index
    %0 = memref.load %arg1[%c0, %c0_0] : memref<2x8xi32, #tpu.memory_space<smem>>
    %1 = arith.index_cast %0 : i32 to index
    %c0_1 = arith.constant 0 : index
    %2 = vector.load %arg2[%1, %c0_1] : memref<50x32xf32, #tpu.memory_space<vmem>>, vector<1x32xf32>
    %c0_2 = arith.constant 0 : index
    %c0_3 = arith.constant 0 : index
    %3 = vector.load %arg8[%c0_2, %c0_3] : memref<16x32xf32, #tpu.memory_space<vmem>>, vector<1x32xf32>
    tpu.vector_store %arg8[%c0_2, %c0_3], %2 {strides = array<i32>} : memref<16x32xf32, #tpu.memory_space<vmem>>, vector<1x32xf32>,
    %c1 = arith.constant 1 : index
    %c0_4 = arith.constant 0 : index
    %4 = memref.load %arg1[%c1, %c0_4] : memref<2x8xi32, #tpu.memory_space<smem>>
    %5 = arith.index_cast %4 : i32 to index
    %c0_5 = arith.constant 0 : index
    %6 = vector.load %arg2[%5, %c0_5] : memref<50x32xf32, #tpu.memory_space<vmem>>, vector<1x32xf32>
    %c1_6 = arith.constant 1 : index
    %c0_7 = arith.constant 0 : index
    %7 = vector.load %arg8[%c1_6, %c0_7] : memref<16x32xf32, #tpu.memory_space<vmem>>, vector<1x32xf32>
    tpu.vector_store %arg8[%c1_6, %c0_7], %6 {strides = array<i32>} : memref<16x32xf32, #tpu.memory_space<vmem>>, vector<1x32xf32>,
    %c0_8 = arith.constant 0 : index
    %c1_9 = arith.constant 1 : index
    %8 = memref.load %arg1[%c0_8, %c1_9] : memref<2x8xi32, #tpu.memory_space<smem>>
    %9 = arith.index_cast %8 : i32 to index
    %c0_10 = arith.constant 0 : index
    %10 = vector.load %arg2[%9, %c0_10] : memref<50x32xf32, #tpu.memory_space<vmem>>, vector<1x32xf32>
    %c2 = arith.constant 2 : index
    %c0_11 = arith.constant 0 : index
    %11 = vector.load %arg8[%c2, %c0_11] : memref<16x32xf32, #tpu.memory_space<vmem>>, vector<1x32xf32>
    tpu.vector_store %arg8[%c2, %c0_11], %10 {strides = array<i32>} : memref<16x32xf32, #tpu.memory_space<vmem>>, vector<1x32xf32>,
    %c1_12 = arith.constant 1 : index
    %c1_13 = arith.constant 1 : index
    %12 = memref.load %arg1[%c1_12, %c1_13] : memref<2x8xi32, #tpu.memory_space<smem>>
    %13 = arith.index_cast %12 : i32 to index
    %c0_14 = arith.constant 0 : index
    %14 = vector.load %arg2[%13, %c0_14] : memref<50x32xf32, #tpu.memory_space<vmem>>, vector<1x32xf32>
    %c3 = arith.constant 3 : index
    %c0_15 = arith.constant 0 : index
    %15 = vector.load %arg8[%c3, %c0_15] : memref<16x32xf32, #tpu.memory_space<vmem>>, vector<1x32xf32>
    tpu.vector_store %arg8[%c3, %c0_15], %14 {strides = array<i32>} : memref<16x32xf32, #tpu.memory_space<vmem>>, vector<1x32xf32>,
    %c0_16 = arith.constant 0 : index
    %c2_17 = arith.constant 2 : index
    %16 = memref.load %arg1[%c0_16, %c2_17] : memref<2x8xi32, #tpu.memory_space<smem>>
    %17 = arith.index_cast %16 : i32 to index
    %c0_18 = arith.constant 0 : index
    %18 = vector.load %arg2[%17, %c0_18] : memref<50x32xf32, #tpu.memory_space<vmem>>, vector<1x32xf32>
    %c4 = arith.constant 4 : index
    %c0_19 = arith.constant 0 : index
    %19 = vector.load %arg8[%c4, %c0_19] : memref<16x32xf32, #tpu.memory_space<vmem>>, vector<1x32xf32>
    tpu.vector_store %arg8[%c4, %c0_19], %18 {strides = array<i32>} : memref<16x32xf32, #tpu.memory_space<vmem>>, vector<1x32xf32>,
    %c1_20 = arith.constant 1 : index
    %c2_21 = arith.constant 2 : index
    %20 = memref.load %arg1[%c1_20, %c2_21] : memref<2x8xi32, #tpu.memory_space<smem>>
    %21 = arith.index_cast %20 : i32 to index
    %c0_22 = arith.constant 0 : index
    %22 = vector.load %arg2[%21, %c0_22] : memref<50x32xf32, #tpu.memory_space<vmem>>, vector<1x32xf32>
    %c5 = arith.constant 5 : index
    %c0_23 = arith.constant 0 : index
    %23 = vector.load %arg8[%c5, %c0_23] : memref<16x32xf32, #tpu.memory_space<vmem>>, vector<1x32xf32>
    tpu.vector_store %arg8[%c5, %c0_23], %22 {strides = array<i32>} : memref<16x32xf32, #tpu.memory_space<vmem>>, vector<1x32xf32>,
    %c0_24 = arith.constant 0 : index
    %c3_25 = arith.constant 3 : index
    %24 = memref.load %arg1[%c0_24, %c3_25] : memref<2x8xi32, #tpu.memory_space<smem>>
    %25 = arith.index_cast %24 : i32 to index
    %c0_26 = arith.constant 0 : index
    %26 = vector.load %arg2[%25, %c0_26] : memref<50x32xf32, #tpu.memory_space<vmem>>, vector<1x32xf32>
    %c6 = arith.constant 6 : index
    %c0_27 = arith.constant 0 : index
    %27 = vector.load %arg8[%c6, %c0_27] : memref<16x32xf32, #tpu.memory_space<vmem>>, vector<1x32xf32>
    tpu.vector_store %arg8[%c6, %c0_27], %26 {strides = array<i32>} : memref<16x32xf32, #tpu.memory_space<vmem>>, vector<1x32xf32>,
    %c1_28 = arith.constant 1 : index
    %c3_29 = arith.constant 3 : index
    %28 = memref.load %arg1[%c1_28, %c3_29] : memref<2x8xi32, #tpu.memory_space<smem>>
    %29 = arith.index_cast %28 : i32 to index
    %c0_30 = arith.constant 0 : index
    %30 = vector.load %arg2[%29, %c0_30] : memref<50x32xf32, #tpu.memory_space<vmem>>, vector<1x32xf32>
    %c7 = arith.constant 7 : index
    %c0_31 = arith.constant 0 : index
    %31 = vector.load %arg8[%c7, %c0_31] : memref<16x32xf32, #tpu.memory_space<vmem>>, vector<1x32xf32>
    tpu.vector_store %arg8[%c7, %c0_31], %30 {strides = array<i32>} : memref<16x32xf32, #tpu.memory_space<vmem>>, vector<1x32xf32>,
    %c0_32 = arith.constant 0 : index
    %c4_33 = arith.constant 4 : index
    %32 = memref.load %arg1[%c0_32, %c4_33] : memref<2x8xi32, #tpu.memory_space<smem>>
    %33 = arith.index_cast %32 : i32 to index
    %c0_34 = arith.constant 0 : index
    %34 = vector.load %arg2[%33, %c0_34] : memref<50x32xf32, #tpu.memory_space<vmem>>, vector<1x32xf32>
    %c8 = arith.constant 8 : index
    %c0_35 = arith.constant 0 : index
    %35 = vector.load %arg8[%c8, %c0_35] : memref<16x32xf32, #tpu.memory_space<vmem>>, vector<1x32xf32>
    tpu.vector_store %arg8[%c8, %c0_35], %34 {strides = array<i32>} : memref<16x32xf32, #tpu.memory_space<vmem>>, vector<1x32xf32>,
    %c1_36 = arith.constant 1 : index
    %c4_37 = arith.constant 4 : index
    %36 = memref.load %arg1[%c1_36, %c4_37] : memref<2x8xi32, #tpu.memory_space<smem>>
    %37 = arith.index_cast %36 : i32 to index
    %c0_38 = arith.constant 0 : index
    %38 = vector.load %arg2[%37, %c0_38] : memref<50x32xf32, #tpu.memory_space<vmem>>, vector<1x32xf32>
    %c9 = arith.constant 9 : index
    %c0_39 = arith.constant 0 : index
    %39 = vector.load %arg8[%c9, %c0_39] : memref<16x32xf32, #tpu.memory_space<vmem>>, vector<1x32xf32>
    tpu.vector_store %arg8[%c9, %c0_39], %38 {strides = array<i32>} : memref<16x32xf32, #tpu.memory_space<vmem>>, vector<1x32xf32>,
    %c0_40 = arith.constant 0 : index
    %c5_41 = arith.constant 5 : index
    %40 = memref.load %arg1[%c0_40, %c5_41] : memref<2x8xi32, #tpu.memory_space<smem>>
    %41 = arith.index_cast %40 : i32 to index
    %c0_42 = arith.constant 0 : index
    %42 = vector.load %arg2[%41, %c0_42] : memref<50x32xf32, #tpu.memory_space<vmem>>, vector<1x32xf32>
    %c10 = arith.constant 10 : index
    %c0_43 = arith.constant 0 : index
    %43 = vector.load %arg8[%c10, %c0_43] : memref<16x32xf32, #tpu.memory_space<vmem>>, vector<1x32xf32>
    tpu.vector_store %arg8[%c10, %c0_43], %42 {strides = array<i32>} : memref<16x32xf32, #tpu.memory_space<vmem>>, vector<1x32xf32>,
    %c1_44 = arith.constant 1 : index
    %c5_45 = arith.constant 5 : index
    %44 = memref.load %arg1[%c1_44, %c5_45] : memref<2x8xi32, #tpu.memory_space<smem>>
    %45 = arith.index_cast %44 : i32 to index
    %c0_46 = arith.constant 0 : index
    %46 = vector.load %arg2[%45, %c0_46] : memref<50x32xf32, #tpu.memory_space<vmem>>, vector<1x32xf32>
    %c11 = arith.constant 11 : index
    %c0_47 = arith.constant 0 : index
    %47 = vector.load %arg8[%c11, %c0_47] : memref<16x32xf32, #tpu.memory_space<vmem>>, vector<1x32xf32>
    tpu.vector_store %arg8[%c11, %c0_47], %46 {strides = array<i32>} : memref<16x32xf32, #tpu.memory_space<vmem>>, vector<1x32xf32>,
    %c0_48 = arith.constant 0 : index
    %c6_49 = arith.constant 6 : index
    %48 = memref.load %arg1[%c0_48, %c6_49] : memref<2x8xi32, #tpu.memory_space<smem>>
    %49 = arith.index_cast %48 : i32 to index
    %c0_50 = arith.constant 0 : index
    %50 = vector.load %arg2[%49, %c0_50] : memref<50x32xf32, #tpu.memory_space<vmem>>, vector<1x32xf32>
    %c12 = arith.constant 12 : index
    %c0_51 = arith.constant 0 : index
    %51 = vector.load %arg8[%c12, %c0_51] : memref<16x32xf32, #tpu.memory_space<vmem>>, vector<1x32xf32>
    tpu.vector_store %arg8[%c12, %c0_51], %50 {strides = array<i32>} : memref<16x32xf32, #tpu.memory_space<vmem>>, vector<1x32xf32>,
    %c1_52 = arith.constant 1 : index
    %c6_53 = arith.constant 6 : index
    %52 = memref.load %arg1[%c1_52, %c6_53] : memref<2x8xi32, #tpu.memory_space<smem>>
    %53 = arith.index_cast %52 : i32 to index
    %c0_54 = arith.constant 0 : index
    %54 = vector.load %arg2[%53, %c0_54] : memref<50x32xf32, #tpu.memory_space<vmem>>, vector<1x32xf32>
    %c13 = arith.constant 13 : index
    %c0_55 = arith.constant 0 : index
    %55 = vector.load %arg8[%c13, %c0_55] : memref<16x32xf32, #tpu.memory_space<vmem>>, vector<1x32xf32>
    tpu.vector_store %arg8[%c13, %c0_55], %54 {strides = array<i32>} : memref<16x32xf32, #tpu.memory_space<vmem>>, vector<1x32xf32>,
    %c0_56 = arith.constant 0 : index
    %c7_57 = arith.constant 7 : index
    %56 = memref.load %arg1[%c0_56, %c7_57] : memref<2x8xi32, #tpu.memory_space<smem>>
    %57 = arith.index_cast %56 : i32 to index
    %c0_58 = arith.constant 0 : index
    %58 = vector.load %arg2[%57, %c0_58] : memref<50x32xf32, #tpu.memory_space<vmem>>, vector<1x32xf32>
    %c14 = arith.constant 14 : index
    %c0_59 = arith.constant 0 : index
    %59 = vector.load %arg8[%c14, %c0_59] : memref<16x32xf32, #tpu.memory_space<vmem>>, vector<1x32xf32>
    tpu.vector_store %arg8[%c14, %c0_59], %58 {strides = array<i32>} : memref<16x32xf32, #tpu.memory_space<vmem>>, vector<1x32xf32>,
    %c1_60 = arith.constant 1 : index
    %c7_61 = arith.constant 7 : index
    %60 = memref.load %arg1[%c1_60, %c7_61] : memref<2x8xi32, #tpu.memory_space<smem>>
    %61 = arith.index_cast %60 : i32 to index
    %c0_62 = arith.constant 0 : index
    %62 = vector.load %arg2[%61, %c0_62] : memref<50x32xf32, #tpu.memory_space<vmem>>, vector<1x32xf32>
    %c15 = arith.constant 15 : index
    %c0_63 = arith.constant 0 : index
    %63 = vector.load %arg8[%c15, %c0_63] : memref<16x32xf32, #tpu.memory_space<vmem>>, vector<1x32xf32>
    tpu.vector_store %arg8[%c15, %c0_63], %62 {strides = array<i32>} : memref<16x32xf32, #tpu.memory_space<vmem>>, vector<1x32xf32>,
    %c0_64 = arith.constant 0 : index
    %c0_65 = arith.constant 0 : index
    %64 = vector.load %arg8[%c0_64, %c0_65] : memref<16x32xf32, #tpu.memory_space<vmem>>, vector<16x32xf32>
    %c0_66 = arith.constant 0 : index
    %c0_67 = arith.constant 0 : index
    %65 = vector.load %arg3[%c0_66, %c0_67] : memref<32x128xf32, #tpu.memory_space<vmem>>, vector<32x128xf32>
    %cst = arith.constant dense<0.000000e+00> : vector<16x128xf32>
    %66 = tpu.matmul %64, %65, %cst {dimension_numbers = #tpu.dot_dimension_numbers<[1], [0], [0], [1], [0, 0, 1, 1], [], []>} : vector<16x32xf32>, vector<32x128xf32>, vector<16x128xf32> -> vector<16x128xf32>
    %c0_68 = arith.constant 0 : index
    %c0_69 = arith.constant 0 : index
    %67 = vector.load %arg5[%c0_68, %c0_69] : memref<1x128xf32, #tpu.memory_space<vmem>>, vector<1x128xf32>
    %68 = vector.broadcast %67 : vector<1x128xf32> to vector<16x128xf32>
    %69 = arith.addf %66, %68 : vector<16x128xf32>
    %c0_70 = arith.constant 0 : index
    %c0_71 = arith.constant 0 : index
    %70 = vector.load %arg9[%c0_70, %c0_71] : memref<16x128xf32, #tpu.memory_space<vmem>>, vector<16x128xf32>
    tpu.vector_store %arg9[%c0_70, %c0_71], %69 {strides = array<i32>} : memref<16x128xf32, #tpu.memory_space<vmem>>, vector<16x128xf32>,
    %c0_72 = arith.constant 0 : index
    %c0_73 = arith.constant 0 : index
    %71 = vector.load %arg4[%c0_72, %c0_73] : memref<32x128xf32, #tpu.memory_space<vmem>>, vector<32x128xf32>
    %cst_74 = arith.constant 0.000000e+00 : f32
    %72 = vector.broadcast %cst_74 : f32 to vector<2x32xf32>
    %cst_75 = arith.constant 0.000000e+00 : f32
    %73 = vector.broadcast %cst_75 : f32 to vector<2x32xf32>
    %c0_i32 = arith.constant 0 : i32
    %c2_i32 = arith.constant 2 : i32
    %74 = arith.muli %c0_i32, %c2_i32 : i32
    %75 = tpu.assume_multiple %74, 2 : i32
    %76 = arith.index_cast %75 : i32 to index
    %c0_76 = arith.constant 0 : index
    %77 = vector.load %arg9[%76, %c0_76] : memref<16x128xf32, #tpu.memory_space<vmem>>, vector<2x128xf32>
    %cst_77 = arith.constant dense<0.000000e+00> : vector<2x128xf32>
    %78 = tpu.matmul %72, %71, %cst_77 {dimension_numbers = #tpu.dot_dimension_numbers<[1], [0], [0], [1], [0, 0, 1, 1], [], []>} : vector<2x32xf32>, vector<32x128xf32>, vector<2x128xf32> -> vector<2x128xf32>
    %79 = arith.addf %77, %78 : vector<2x128xf32>
    %80 = vector.extract_strided_slice %79 {offsets = [0, 0], sizes = [2, 32], strides = [1, 1]} : vector<2x128xf32> to vector<2x32xf32>
    %81 = arith.negf %80 : vector<2x32xf32>
    %82 = math.exp %81 : vector<2x32xf32>
    %cst_78 = arith.constant 1.000000e+00 : f32
    %83 = vector.broadcast %cst_78 : f32 to vector<2x32xf32>
    %84 = arith.addf %83, %82 : vector<2x32xf32>
    %85 = arith.divf %83, %84 : vector<2x32xf32>
    %86 = vector.extract_strided_slice %79 {offsets = [0, 32], sizes = [2, 32], strides = [1, 1]} : vector<2x128xf32> to vector<2x32xf32>
    %87 = arith.negf %86 : vector<2x32xf32>
    %88 = math.exp %87 : vector<2x32xf32>
    %cst_79 = arith.constant 1.000000e+00 : f32
    %89 = vector.broadcast %cst_79 : f32 to vector<2x32xf32>
    %90 = arith.addf %89, %88 : vector<2x32xf32>
    %91 = arith.divf %89, %90 : vector<2x32xf32>
    %92 = vector.extract_strided_slice %79 {offsets = [0, 64], sizes = [2, 32], strides = [1, 1]} : vector<2x128xf32> to vector<2x32xf32>
    %93 = math.tanh %92 : vector<2x32xf32>
    %94 = vector.extract_strided_slice %79 {offsets = [0, 96], sizes = [2, 32], strides = [1, 1]} : vector<2x128xf32> to vector<2x32xf32>
    %95 = arith.negf %94 : vector<2x32xf32>
    %96 = math.exp %95 : vector<2x32xf32>
    %cst_80 = arith.constant 1.000000e+00 : f32
    %97 = vector.broadcast %cst_80 : f32 to vector<2x32xf32>
    %98 = arith.addf %97, %96 : vector<2x32xf32>
    %99 = arith.divf %97, %98 : vector<2x32xf32>
    %100 = arith.mulf %91, %73 : vector<2x32xf32>
    %101 = arith.mulf %85, %93 : vector<2x32xf32>
    %102 = arith.addf %100, %101 : vector<2x32xf32>
    %103 = math.tanh %102 : vector<2x32xf32>
    %104 = arith.mulf %99, %103 : vector<2x32xf32>
    %c1_i32 = arith.constant 1 : i32
    %c2_i32_81 = arith.constant 2 : i32
    %105 = arith.muli %c1_i32, %c2_i32_81 : i32
    %106 = tpu.assume_multiple %105, 2 : i32
    %107 = arith.index_cast %106 : i32 to index
    %c0_82 = arith.constant 0 : index
    %108 = vector.load %arg9[%107, %c0_82] : memref<16x128xf32, #tpu.memory_space<vmem>>, vector<2x128xf32>
    %cst_83 = arith.constant dense<0.000000e+00> : vector<2x128xf32>
    %109 = tpu.matmul %104, %71, %cst_83 {dimension_numbers = #tpu.dot_dimension_numbers<[1], [0], [0], [1], [0, 0, 1, 1], [], []>} : vector<2x32xf32>, vector<32x128xf32>, vector<2x128xf32> -> vector<2x128xf32>
    %110 = arith.addf %108, %109 : vector<2x128xf32>
    %111 = vector.extract_strided_slice %110 {offsets = [0, 0], sizes = [2, 32], strides = [1, 1]} : vector<2x128xf32> to vector<2x32xf32>
    %112 = arith.negf %111 : vector<2x32xf32>
    %113 = math.exp %112 : vector<2x32xf32>
    %cst_84 = arith.constant 1.000000e+00 : f32
    %114 = vector.broadcast %cst_84 : f32 to vector<2x32xf32>
    %115 = arith.addf %114, %113 : vector<2x32xf32>
    %116 = arith.divf %114, %115 : vector<2x32xf32>
    %117 = vector.extract_strided_slice %110 {offsets = [0, 32], sizes = [2, 32], strides = [1, 1]} : vector<2x128xf32> to vector<2x32xf32>
    %118 = arith.negf %117 : vector<2x32xf32>
    %119 = math.exp %118 : vector<2x32xf32>
    %cst_85 = arith.constant 1.000000e+00 : f32
    %120 = vector.broadcast %cst_85 : f32 to vector<2x32xf32>
    %121 = arith.addf %120, %119 : vector<2x32xf32>
    %122 = arith.divf %120, %121 : vector<2x32xf32>
    %123 = vector.extract_strided_slice %110 {offsets = [0, 64], sizes = [2, 32], strides = [1, 1]} : vector<2x128xf32> to vector<2x32xf32>
    %124 = math.tanh %123 : vector<2x32xf32>
    %125 = vector.extract_strided_slice %110 {offsets = [0, 96], sizes = [2, 32], strides = [1, 1]} : vector<2x128xf32> to vector<2x32xf32>
    %126 = arith.negf %125 : vector<2x32xf32>
    %127 = math.exp %126 : vector<2x32xf32>
    %cst_86 = arith.constant 1.000000e+00 : f32
    %128 = vector.broadcast %cst_86 : f32 to vector<2x32xf32>
    %129 = arith.addf %128, %127 : vector<2x32xf32>
    %130 = arith.divf %128, %129 : vector<2x32xf32>
    %131 = arith.mulf %122, %102 : vector<2x32xf32>
    %132 = arith.mulf %116, %124 : vector<2x32xf32>
    %133 = arith.addf %131, %132 : vector<2x32xf32>
    %134 = math.tanh %133 : vector<2x32xf32>
    %135 = arith.mulf %130, %134 : vector<2x32xf32>
    %c2_i32_87 = arith.constant 2 : i32
    %c2_i32_88 = arith.constant 2 : i32
    %136 = arith.muli %c2_i32_87, %c2_i32_88 : i32
    %137 = tpu.assume_multiple %136, 2 : i32
    %138 = arith.index_cast %137 : i32 to index
    %c0_89 = arith.constant 0 : index
    %139 = vector.load %arg9[%138, %c0_89] : memref<16x128xf32, #tpu.memory_space<vmem>>, vector<2x128xf32>
    %cst_90 = arith.constant dense<0.000000e+00> : vector<2x128xf32>
    %140 = tpu.matmul %135, %71, %cst_90 {dimension_numbers = #tpu.dot_dimension_numbers<[1], [0], [0], [1], [0, 0, 1, 1], [], []>} : vector<2x32xf32>, vector<32x128xf32>, vector<2x128xf32> -> vector<2x128xf32>
    %141 = arith.addf %139, %140 : vector<2x128xf32>
    %142 = vector.extract_strided_slice %141 {offsets = [0, 0], sizes = [2, 32], strides = [1, 1]} : vector<2x128xf32> to vector<2x32xf32>
    %143 = arith.negf %142 : vector<2x32xf32>
    %144 = math.exp %143 : vector<2x32xf32>
    %cst_91 = arith.constant 1.000000e+00 : f32
    %145 = vector.broadcast %cst_91 : f32 to vector<2x32xf32>
    %146 = arith.addf %145, %144 : vector<2x32xf32>
    %147 = arith.divf %145, %146 : vector<2x32xf32>
    %148 = vector.extract_strided_slice %141 {offsets = [0, 32], sizes = [2, 32], strides = [1, 1]} : vector<2x128xf32> to vector<2x32xf32>
    %149 = arith.negf %148 : vector<2x32xf32>
    %150 = math.exp %149 : vector<2x32xf32>
    %cst_92 = arith.constant 1.000000e+00 : f32
    %151 = vector.broadcast %cst_92 : f32 to vector<2x32xf32>
    %152 = arith.addf %151, %150 : vector<2x32xf32>
    %153 = arith.divf %151, %152 : vector<2x32xf32>
    %154 = vector.extract_strided_slice %141 {offsets = [0, 64], sizes = [2, 32], strides = [1, 1]} : vector<2x128xf32> to vector<2x32xf32>
    %155 = math.tanh %154 : vector<2x32xf32>
    %156 = vector.extract_strided_slice %141 {offsets = [0, 96], sizes = [2, 32], strides = [1, 1]} : vector<2x128xf32> to vector<2x32xf32>
    %157 = arith.negf %156 : vector<2x32xf32>
    %158 = math.exp %157 : vector<2x32xf32>
    %cst_93 = arith.constant 1.000000e+00 : f32
    %159 = vector.broadcast %cst_93 : f32 to vector<2x32xf32>
    %160 = arith.addf %159, %158 : vector<2x32xf32>
    %161 = arith.divf %159, %160 : vector<2x32xf32>
    %162 = arith.mulf %153, %133 : vector<2x32xf32>
    %163 = arith.mulf %147, %155 : vector<2x32xf32>
    %164 = arith.addf %162, %163 : vector<2x32xf32>
    %165 = math.tanh %164 : vector<2x32xf32>
    %166 = arith.mulf %161, %165 : vector<2x32xf32>
    %c3_i32 = arith.constant 3 : i32
    %c2_i32_94 = arith.constant 2 : i32
    %167 = arith.muli %c3_i32, %c2_i32_94 : i32
    %168 = tpu.assume_multiple %167, 2 : i32
    %169 = arith.index_cast %168 : i32 to index
    %c0_95 = arith.constant 0 : index
    %170 = vector.load %arg9[%169, %c0_95] : memref<16x128xf32, #tpu.memory_space<vmem>>, vector<2x128xf32>
    %cst_96 = arith.constant dense<0.000000e+00> : vector<2x128xf32>
    %171 = tpu.matmul %166, %71, %cst_96 {dimension_numbers = #tpu.dot_dimension_numbers<[1], [0], [0], [1], [0, 0, 1, 1], [], []>} : vector<2x32xf32>, vector<32x128xf32>, vector<2x128xf32> -> vector<2x128xf32>
    %172 = arith.addf %170, %171 : vector<2x128xf32>
    %173 = vector.extract_strided_slice %172 {offsets = [0, 0], sizes = [2, 32], strides = [1, 1]} : vector<2x128xf32> to vector<2x32xf32>
    %174 = arith.negf %173 : vector<2x32xf32>
    %175 = math.exp %174 : vector<2x32xf32>
    %cst_97 = arith.constant 1.000000e+00 : f32
    %176 = vector.broadcast %cst_97 : f32 to vector<2x32xf32>
    %177 = arith.addf %176, %175 : vector<2x32xf32>
    %178 = arith.divf %176, %177 : vector<2x32xf32>
    %179 = vector.extract_strided_slice %172 {offsets = [0, 32], sizes = [2, 32], strides = [1, 1]} : vector<2x128xf32> to vector<2x32xf32>
    %180 = arith.negf %179 : vector<2x32xf32>
    %181 = math.exp %180 : vector<2x32xf32>
    %cst_98 = arith.constant 1.000000e+00 : f32
    %182 = vector.broadcast %cst_98 : f32 to vector<2x32xf32>
    %183 = arith.addf %182, %181 : vector<2x32xf32>
    %184 = arith.divf %182, %183 : vector<2x32xf32>
    %185 = vector.extract_strided_slice %172 {offsets = [0, 64], sizes = [2, 32], strides = [1, 1]} : vector<2x128xf32> to vector<2x32xf32>
    %186 = math.tanh %185 : vector<2x32xf32>
    %187 = vector.extract_strided_slice %172 {offsets = [0, 96], sizes = [2, 32], strides = [1, 1]} : vector<2x128xf32> to vector<2x32xf32>
    %188 = arith.negf %187 : vector<2x32xf32>
    %189 = math.exp %188 : vector<2x32xf32>
    %cst_99 = arith.constant 1.000000e+00 : f32
    %190 = vector.broadcast %cst_99 : f32 to vector<2x32xf32>
    %191 = arith.addf %190, %189 : vector<2x32xf32>
    %192 = arith.divf %190, %191 : vector<2x32xf32>
    %193 = arith.mulf %184, %164 : vector<2x32xf32>
    %194 = arith.mulf %178, %186 : vector<2x32xf32>
    %195 = arith.addf %193, %194 : vector<2x32xf32>
    %196 = math.tanh %195 : vector<2x32xf32>
    %197 = arith.mulf %192, %196 : vector<2x32xf32>
    %c4_i32 = arith.constant 4 : i32
    %c2_i32_100 = arith.constant 2 : i32
    %198 = arith.muli %c4_i32, %c2_i32_100 : i32
    %199 = tpu.assume_multiple %198, 2 : i32
    %200 = arith.index_cast %199 : i32 to index
    %c0_101 = arith.constant 0 : index
    %201 = vector.load %arg9[%200, %c0_101] : memref<16x128xf32, #tpu.memory_space<vmem>>, vector<2x128xf32>
    %cst_102 = arith.constant dense<0.000000e+00> : vector<2x128xf32>
    %202 = tpu.matmul %197, %71, %cst_102 {dimension_numbers = #tpu.dot_dimension_numbers<[1], [0], [0], [1], [0, 0, 1, 1], [], []>} : vector<2x32xf32>, vector<32x128xf32>, vector<2x128xf32> -> vector<2x128xf32>
    %203 = arith.addf %201, %202 : vector<2x128xf32>
    %204 = vector.extract_strided_slice %203 {offsets = [0, 0], sizes = [2, 32], strides = [1, 1]} : vector<2x128xf32> to vector<2x32xf32>
    %205 = arith.negf %204 : vector<2x32xf32>
    %206 = math.exp %205 : vector<2x32xf32>
    %cst_103 = arith.constant 1.000000e+00 : f32
    %207 = vector.broadcast %cst_103 : f32 to vector<2x32xf32>
    %208 = arith.addf %207, %206 : vector<2x32xf32>
    %209 = arith.divf %207, %208 : vector<2x32xf32>
    %210 = vector.extract_strided_slice %203 {offsets = [0, 32], sizes = [2, 32], strides = [1, 1]} : vector<2x128xf32> to vector<2x32xf32>
    %211 = arith.negf %210 : vector<2x32xf32>
    %212 = math.exp %211 : vector<2x32xf32>
    %cst_104 = arith.constant 1.000000e+00 : f32
    %213 = vector.broadcast %cst_104 : f32 to vector<2x32xf32>
    %214 = arith.addf %213, %212 : vector<2x32xf32>
    %215 = arith.divf %213, %214 : vector<2x32xf32>
    %216 = vector.extract_strided_slice %203 {offsets = [0, 64], sizes = [2, 32], strides = [1, 1]} : vector<2x128xf32> to vector<2x32xf32>
    %217 = math.tanh %216 : vector<2x32xf32>
    %218 = vector.extract_strided_slice %203 {offsets = [0, 96], sizes = [2, 32], strides = [1, 1]} : vector<2x128xf32> to vector<2x32xf32>
    %219 = arith.negf %218 : vector<2x32xf32>
    %220 = math.exp %219 : vector<2x32xf32>
    %cst_105 = arith.constant 1.000000e+00 : f32
    %221 = vector.broadcast %cst_105 : f32 to vector<2x32xf32>
    %222 = arith.addf %221, %220 : vector<2x32xf32>
    %223 = arith.divf %221, %222 : vector<2x32xf32>
    %224 = arith.mulf %215, %195 : vector<2x32xf32>
    %225 = arith.mulf %209, %217 : vector<2x32xf32>
    %226 = arith.addf %224, %225 : vector<2x32xf32>
    %227 = math.tanh %226 : vector<2x32xf32>
    %228 = arith.mulf %223, %227 : vector<2x32xf32>
    %c5_i32 = arith.constant 5 : i32
    %c2_i32_106 = arith.constant 2 : i32
    %229 = arith.muli %c5_i32, %c2_i32_106 : i32
    %230 = tpu.assume_multiple %229, 2 : i32
    %231 = arith.index_cast %230 : i32 to index
    %c0_107 = arith.constant 0 : index
    %232 = vector.load %arg9[%231, %c0_107] : memref<16x128xf32, #tpu.memory_space<vmem>>, vector<2x128xf32>
    %cst_108 = arith.constant dense<0.000000e+00> : vector<2x128xf32>
    %233 = tpu.matmul %228, %71, %cst_108 {dimension_numbers = #tpu.dot_dimension_numbers<[1], [0], [0], [1], [0, 0, 1, 1], [], []>} : vector<2x32xf32>, vector<32x128xf32>, vector<2x128xf32> -> vector<2x128xf32>
    %234 = arith.addf %232, %233 : vector<2x128xf32>
    %235 = vector.extract_strided_slice %234 {offsets = [0, 0], sizes = [2, 32], strides = [1, 1]} : vector<2x128xf32> to vector<2x32xf32>
    %236 = arith.negf %235 : vector<2x32xf32>
    %237 = math.exp %236 : vector<2x32xf32>
    %cst_109 = arith.constant 1.000000e+00 : f32
    %238 = vector.broadcast %cst_109 : f32 to vector<2x32xf32>
    %239 = arith.addf %238, %237 : vector<2x32xf32>
    %240 = arith.divf %238, %239 : vector<2x32xf32>
    %241 = vector.extract_strided_slice %234 {offsets = [0, 32], sizes = [2, 32], strides = [1, 1]} : vector<2x128xf32> to vector<2x32xf32>
    %242 = arith.negf %241 : vector<2x32xf32>
    %243 = math.exp %242 : vector<2x32xf32>
    %cst_110 = arith.constant 1.000000e+00 : f32
    %244 = vector.broadcast %cst_110 : f32 to vector<2x32xf32>
    %245 = arith.addf %244, %243 : vector<2x32xf32>
    %246 = arith.divf %244, %245 : vector<2x32xf32>
    %247 = vector.extract_strided_slice %234 {offsets = [0, 64], sizes = [2, 32], strides = [1, 1]} : vector<2x128xf32> to vector<2x32xf32>
    %248 = math.tanh %247 : vector<2x32xf32>
    %249 = vector.extract_strided_slice %234 {offsets = [0, 96], sizes = [2, 32], strides = [1, 1]} : vector<2x128xf32> to vector<2x32xf32>
    %250 = arith.negf %249 : vector<2x32xf32>
    %251 = math.exp %250 : vector<2x32xf32>
    %cst_111 = arith.constant 1.000000e+00 : f32
    %252 = vector.broadcast %cst_111 : f32 to vector<2x32xf32>
    %253 = arith.addf %252, %251 : vector<2x32xf32>
    %254 = arith.divf %252, %253 : vector<2x32xf32>
    %255 = arith.mulf %246, %226 : vector<2x32xf32>
    %256 = arith.mulf %240, %248 : vector<2x32xf32>
    %257 = arith.addf %255, %256 : vector<2x32xf32>
    %258 = math.tanh %257 : vector<2x32xf32>
    %259 = arith.mulf %254, %258 : vector<2x32xf32>
    %c6_i32 = arith.constant 6 : i32
    %c2_i32_112 = arith.constant 2 : i32
    %260 = arith.muli %c6_i32, %c2_i32_112 : i32
    %261 = tpu.assume_multiple %260, 2 : i32
    %262 = arith.index_cast %261 : i32 to index
    %c0_113 = arith.constant 0 : index
    %263 = vector.load %arg9[%262, %c0_113] : memref<16x128xf32, #tpu.memory_space<vmem>>, vector<2x128xf32>
    %cst_114 = arith.constant dense<0.000000e+00> : vector<2x128xf32>
    %264 = tpu.matmul %259, %71, %cst_114 {dimension_numbers = #tpu.dot_dimension_numbers<[1], [0], [0], [1], [0, 0, 1, 1], [], []>} : vector<2x32xf32>, vector<32x128xf32>, vector<2x128xf32> -> vector<2x128xf32>
    %265 = arith.addf %263, %264 : vector<2x128xf32>
    %266 = vector.extract_strided_slice %265 {offsets = [0, 0], sizes = [2, 32], strides = [1, 1]} : vector<2x128xf32> to vector<2x32xf32>
    %267 = arith.negf %266 : vector<2x32xf32>
    %268 = math.exp %267 : vector<2x32xf32>
    %cst_115 = arith.constant 1.000000e+00 : f32
    %269 = vector.broadcast %cst_115 : f32 to vector<2x32xf32>
    %270 = arith.addf %269, %268 : vector<2x32xf32>
    %271 = arith.divf %269, %270 : vector<2x32xf32>
    %272 = vector.extract_strided_slice %265 {offsets = [0, 32], sizes = [2, 32], strides = [1, 1]} : vector<2x128xf32> to vector<2x32xf32>
    %273 = arith.negf %272 : vector<2x32xf32>
    %274 = math.exp %273 : vector<2x32xf32>
    %cst_116 = arith.constant 1.000000e+00 : f32
    %275 = vector.broadcast %cst_116 : f32 to vector<2x32xf32>
    %276 = arith.addf %275, %274 : vector<2x32xf32>
    %277 = arith.divf %275, %276 : vector<2x32xf32>
    %278 = vector.extract_strided_slice %265 {offsets = [0, 64], sizes = [2, 32], strides = [1, 1]} : vector<2x128xf32> to vector<2x32xf32>
    %279 = math.tanh %278 : vector<2x32xf32>
    %280 = vector.extract_strided_slice %265 {offsets = [0, 96], sizes = [2, 32], strides = [1, 1]} : vector<2x128xf32> to vector<2x32xf32>
    %281 = arith.negf %280 : vector<2x32xf32>
    %282 = math.exp %281 : vector<2x32xf32>
    %cst_117 = arith.constant 1.000000e+00 : f32
    %283 = vector.broadcast %cst_117 : f32 to vector<2x32xf32>
    %284 = arith.addf %283, %282 : vector<2x32xf32>
    %285 = arith.divf %283, %284 : vector<2x32xf32>
    %286 = arith.mulf %277, %257 : vector<2x32xf32>
    %287 = arith.mulf %271, %279 : vector<2x32xf32>
    %288 = arith.addf %286, %287 : vector<2x32xf32>
    %289 = math.tanh %288 : vector<2x32xf32>
    %290 = arith.mulf %285, %289 : vector<2x32xf32>
    %c7_i32 = arith.constant 7 : i32
    %c2_i32_118 = arith.constant 2 : i32
    %291 = arith.muli %c7_i32, %c2_i32_118 : i32
    %292 = tpu.assume_multiple %291, 2 : i32
    %293 = arith.index_cast %292 : i32 to index
    %c0_119 = arith.constant 0 : index
    %294 = vector.load %arg9[%293, %c0_119] : memref<16x128xf32, #tpu.memory_space<vmem>>, vector<2x128xf32>
    %cst_120 = arith.constant dense<0.000000e+00> : vector<2x128xf32>
    %295 = tpu.matmul %290, %71, %cst_120 {dimension_numbers = #tpu.dot_dimension_numbers<[1], [0], [0], [1], [0, 0, 1, 1], [], []>} : vector<2x32xf32>, vector<32x128xf32>, vector<2x128xf32> -> vector<2x128xf32>
    %296 = arith.addf %294, %295 : vector<2x128xf32>
    %297 = vector.extract_strided_slice %296 {offsets = [0, 0], sizes = [2, 32], strides = [1, 1]} : vector<2x128xf32> to vector<2x32xf32>
    %298 = arith.negf %297 : vector<2x32xf32>
    %299 = math.exp %298 : vector<2x32xf32>
    %cst_121 = arith.constant 1.000000e+00 : f32
    %300 = vector.broadcast %cst_121 : f32 to vector<2x32xf32>
    %301 = arith.addf %300, %299 : vector<2x32xf32>
    %302 = arith.divf %300, %301 : vector<2x32xf32>
    %303 = vector.extract_strided_slice %296 {offsets = [0, 32], sizes = [2, 32], strides = [1, 1]} : vector<2x128xf32> to vector<2x32xf32>
    %304 = arith.negf %303 : vector<2x32xf32>
    %305 = math.exp %304 : vector<2x32xf32>
    %cst_122 = arith.constant 1.000000e+00 : f32
    %306 = vector.broadcast %cst_122 : f32 to vector<2x32xf32>
    %307 = arith.addf %306, %305 : vector<2x32xf32>
    %308 = arith.divf %306, %307 : vector<2x32xf32>
    %309 = vector.extract_strided_slice %296 {offsets = [0, 64], sizes = [2, 32], strides = [1, 1]} : vector<2x128xf32> to vector<2x32xf32>
    %310 = math.tanh %309 : vector<2x32xf32>
    %311 = vector.extract_strided_slice %296 {offsets = [0, 96], sizes = [2, 32], strides = [1, 1]} : vector<2x128xf32> to vector<2x32xf32>
    %312 = arith.negf %311 : vector<2x32xf32>
    %313 = math.exp %312 : vector<2x32xf32>
    %cst_123 = arith.constant 1.000000e+00 : f32
    %314 = vector.broadcast %cst_123 : f32 to vector<2x32xf32>
    %315 = arith.addf %314, %313 : vector<2x32xf32>
    %316 = arith.divf %314, %315 : vector<2x32xf32>
    %317 = arith.mulf %308, %288 : vector<2x32xf32>
    %318 = arith.mulf %302, %310 : vector<2x32xf32>
    %319 = arith.addf %317, %318 : vector<2x32xf32>
    %320 = math.tanh %319 : vector<2x32xf32>
    %321 = arith.mulf %316, %320 : vector<2x32xf32>
    %c8_i32 = arith.constant 8 : i32
    %c0_124 = arith.constant 0 : index
    %c0_125 = arith.constant 0 : index
    %322 = vector.load %arg6[%c0_124, %c0_125] : memref<32x4xf32, #tpu.memory_space<vmem>>, vector<32x4xf32>
    %cst_126 = arith.constant dense<0.000000e+00> : vector<2x4xf32>
    %323 = tpu.matmul %321, %322, %cst_126 {dimension_numbers = #tpu.dot_dimension_numbers<[1], [0], [0], [1], [0, 0, 1, 1], [], []>} : vector<2x32xf32>, vector<32x4xf32>, vector<2x4xf32> -> vector<2x4xf32>
    %c0_127 = arith.constant 0 : index
    %c0_128 = arith.constant 0 : index
    %324 = vector.load %arg7[%c0_127, %c0_128] : memref<2x4xf32, #tpu.memory_space<vmem>>, vector<2x4xf32>
    tpu.vector_store %arg7[%c0_127, %c0_128], %323 {strides = array<i32>} : memref<2x4xf32, #tpu.memory_space<vmem>>, vector<2x4xf32>,
    return
  }
  func.func @transform_0(%arg0: i32, %arg1: memref<2x8xi32, #tpu.memory_space<smem>>) -> (i32, i32) {
    %c0_i32 = arith.constant 0 : i32
    %c0_i32_0 = arith.constant 0 : i32
    %c0_i32_1 = arith.constant 0 : i32
    return %c0_i32, %c0_i32_0 : i32, i32
  }
  func.func @transform_1(%arg0: i32, %arg1: memref<2x8xi32, #tpu.memory_space<smem>>) -> (i32, i32) {
    %c0_i32 = arith.constant 0 : i32
    %c0_i32_0 = arith.constant 0 : i32
    %c0_i32_1 = arith.constant 0 : i32
    return %c0_i32, %c0_i32_0 : i32, i32
  }
  func.func @transform_2(%arg0: i32, %arg1: memref<2x8xi32, #tpu.memory_space<smem>>) -> (i32, i32) {
    %c0_i32 = arith.constant 0 : i32
    %c0_i32_0 = arith.constant 0 : i32
    %c0_i32_1 = arith.constant 0 : i32
    return %c0_i32, %c0_i32_0 : i32, i32
  }
  func.func @transform_3(%arg0: i32, %arg1: memref<2x8xi32, #tpu.memory_space<smem>>) -> (i32, i32) {
    %c0_i32 = arith.constant 0 : i32
    %c0_i32_0 = arith.constant 0 : i32
    %c0_i32_1 = arith.constant 0 : i32
    return %c0_i32, %c0_i32_0 : i32, i32
  }
  func.func @transform_4(%arg0: i32, %arg1: memref<2x8xi32, #tpu.memory_space<smem>>) -> (i32, i32) {
    %c0_i32 = arith.constant 0 : i32
    %c0_i32_0 = arith.constant 0 : i32
    %c0_i32_1 = arith.constant 0 : i32
    return %c0_i32, %c0_i32_0 : i32, i32
  }
  func.func @transform_5(%arg0: i32, %arg1: memref<2x8xi32, #tpu.memory_space<smem>>) -> (i32, i32) {
    %c0_i32 = arith.constant 0 : i32
    %c0_i32_0 = arith.constant 0 : i32
    %c0_i32_1 = arith.constant 0 : i32
    return %c0_i32, %c0_i32_0 : i32, i32
  }
}

</mosaic_0001>

<llo_original>
// kernel: tpu_custom_call.1
$region0: #{tpu_custom_call.1}
  #allocation0 [shape = 'u32[]', space=smem, size = 0x4, offset = 0x4, fixed_abs, tag = 'smem constant byte address 0x4 - core index']
  #allocation1 [shape = 'u32[144,128]{1,0:T(1,128)}', space=vmem, size = 0x12000, scoped, tag = 'internal scratch']
  #allocation2 [shape = 'f32[16,32]{1,0:T(8,128)}', space=vmem, size = 0x2000, scoped, tag = 'scratch operand']
  #allocation3 [shape = 'f32[16,128]{1,0:T(8,128)}', space=vmem, size = 0x2000, scoped, tag = 'scratch operand']
  #allocation4 [shape = 's32[1]{0}', space=sflag, size = 0x4, scoped, tag = 'scoped memory for tpu_custom_call.1']
  #allocation5 [shape = 'u8[1024]{0}', space=smem, size = 0x400, scoped, tag = 'prefetched SMEM operand 0']
  %s0 = inlined_call_operand.vmem [shape: s32[2,8], index: 0, kind: input, shape index: {}]
  %s1 = inlined_call_operand.vmem [shape: f32[50,32], index: 1, kind: input, shape index: {}]
  %s2 = inlined_call_operand.vmem [shape: f32[32,128], index: 2, kind: input, shape index: {}]
  %s3 = inlined_call_operand.vmem [shape: f32[32,128], index: 3, kind: input, shape index: {}]
  %s4 = inlined_call_operand.vmem [shape: f32[1,128], index: 4, kind: input, shape index: {}]
  %s5 = inlined_call_operand.vmem [shape: f32[32,4], index: 5, kind: input, shape index: {}]
  %s6 = inlined_call_operand.hbm [shape: f32[2,4], index: 6, kind: output, shape index: {}]
  %s7 = sld [smem:[#allocation0]]
  $region30: #{tpu_custom_call.1} parent=0
    _
  %s9 = ssub.s32 1, %s7
  %s10 = scalar_select 0, %s9, %s7
  %s11 = sshll.u32 %s0, 4
  %s12 = int_to_ptr.vmem [resolvable:$true] %s11
  %14 = dma.vmem_to_smem %s12, 32, [#allocation5], [#allocation4]
  %15 = dma.done [#allocation4], 32
  %16 = sfence
  $region1: #{tpu_custom_call.1} parent=0
    #allocation6 [shape = 'u8[1024]{0}', space=vmem, size = 0x400, scoped, tag = 'output window, operand 0, single buffered']
    #allocation7 [shape = 's32[1]{0}', space=sflag, size = 0x4, scoped, tag = 'scoped memory for tpu_custom_call.1']
    %17 = vsyncpa [#allocation7], 0
    // Predicated region
    $region2: #{tpu_custom_call.1} parent=1 // pred_check
      _
    $region3: #{tpu_custom_call.1} parent=1 // pred_check_branch
      %19 = sbr.rel (0) target = $region5
    $region4: #{tpu_custom_call.1} parent=1 // pred_region
      _
    $region5: #{tpu_custom_call.1} parent=1 // pred_fallthru
      _
    // Predicated region
    $region6: #{tpu_custom_call.1} parent=1 // pred_check
      _
    $region7: #{tpu_custom_call.1} parent=1 // pred_check_branch
      %21 = sbr.rel (0) target = $region9
    $region8: #{tpu_custom_call.1} parent=1 // pred_region
      _
    $region9: #{tpu_custom_call.1} parent=1 // pred_fallthru
      _
    // Predicated region
    $region10: #{tpu_custom_call.1} parent=1 // pred_check
      _
    $region11: #{tpu_custom_call.1} parent=1 // pred_check_branch
      %23 = sbr.rel (0) target = $region13
    $region12: #{tpu_custom_call.1} parent=1 // pred_region
      _
    $region13: #{tpu_custom_call.1} parent=1 // pred_fallthru
      _
    // Predicated region
    $region14: #{tpu_custom_call.1} parent=1 // pred_check
      _
    $region15: #{tpu_custom_call.1} parent=1 // pred_check_branch
      %25 = sbr.rel (0) target = $region17
    $region16: #{tpu_custom_call.1} parent=1 // pred_region
      _
    $region17: #{tpu_custom_call.1} parent=1 // pred_fallthru
      _
    // Predicated region
    $region18: #{tpu_custom_call.1} parent=1 // pred_check
      _
    $region19: #{tpu_custom_call.1} parent=1 // pred_check_branch
      %27 = sbr.rel (0) target = $region21
    $region20: #{tpu_custom_call.1} parent=1 // pred_region
      _
    $region21: #{tpu_custom_call.1} parent=1 // pred_fallthru
      _
    %s28 = sld [smem:[#allocation5]]
    %s29 = scalar_lea.vmem %s1, %s28
    %v30 = vld [vmem:[%s29] sm:$0x1]
    %vm31 = vcmask 253952
    %32 = vst.msk [vmem:[#allocation2] sm:$0x1] %vm31, %v30
    %s33 = sld [smem:[#allocation5 + $0x80]]
    %s34 = scalar_lea.vmem %s1, %s33
    %v35 = vld [vmem:[%s34] sm:$0x1]
    %36 = vst.msk [vmem:[#allocation2 + $0x1] sm:$0x1] %vm31, %v35
    %s37 = sld [smem:[#allocation5 + $0x1]]
    %s38 = scalar_lea.vmem %s1, %s37
    %v39 = vld [vmem:[%s38] sm:$0x1]
    %40 = vst.msk [vmem:[#allocation2 + $0x2] sm:$0x1] %vm31, %v39
    %s41 = sld [smem:[#allocation5 + $0x81]]
    %s42 = scalar_lea.vmem %s1, %s41
    %v43 = vld [vmem:[%s42] sm:$0x1]
    %44 = vst.msk [vmem:[#allocation2 + $0x3] sm:$0x1] %vm31, %v43
    %s45 = sld [smem:[#allocation5 + $0x2]]
    %s46 = scalar_lea.vmem %s1, %s45
    %v47 = vld [vmem:[%s46] sm:$0x1]
    %48 = vst.msk [vmem:[#allocation2 + $0x4] sm:$0x1] %vm31, %v47
    %s49 = sld [smem:[#allocation5 + $0x82]]
    %s50 = scalar_lea.vmem %s1, %s49
    %v51 = vld [vmem:[%s50] sm:$0x1]
    %52 = vst.msk [vmem:[#allocation2 + $0x5] sm:$0x1] %vm31, %v51
    %s53 = sld [smem:[#allocation5 + $0x3]]
    %s54 = scalar_lea.vmem %s1, %s53
    %v55 = vld [vmem:[%s54] sm:$0x1]
    %56 = vst.msk [vmem:[#allocation2 + $0x6] sm:$0x1] %vm31, %v55
    %s57 = sld [smem:[#allocation5 + $0x83]]
    %s58 = scalar_lea.vmem %s1, %s57
    %v59 = vld [vmem:[%s58] sm:$0x1]
    %60 = vst.msk [vmem:[#allocation2 + $0x7] sm:$0x1] %vm31, %v59
    %s61 = sld [smem:[#allocation5 + $0x4]]
    %s62 = scalar_lea.vmem %s1, %s61
    %v63 = vld [vmem:[%s62] sm:$0x1]
    %64 = vst.msk [vmem:[#allocation2 + $0x8] sm:$0x1] %vm31, %v63
    %s65 = sld [smem:[#allocation5 + $0x84]]
    %s66 = scalar_lea.vmem %s1, %s65
    %v67 = vld [vmem:[%s66] sm:$0x1]
    %68 = vst.msk [vmem:[#allocation2 + $0x9] sm:$0x1] %vm31, %v67
    %s69 = sld [smem:[#allocation5 + $0x5]]
    %s70 = scalar_lea.vmem %s1, %s69
    %v71 = vld [vmem:[%s70] sm:$0x1]
    %72 = vst.msk [vmem:[#allocation2 + $0xa] sm:$0x1] %vm31, %v71
    %s73 = sld [smem:[#allocation5 + $0x85]]
    %s74 = scalar_lea.vmem %s1, %s73
    %v75 = vld [vmem:[%s74] sm:$0x1]
    %76 = vst.msk [vmem:[#allocation2 + $0xb] sm:$0x1] %vm31, %v75
    %s77 = sld [smem:[#allocation5 + $0x6]]
    %s78 = scalar_lea.vmem %s1, %s77
    %v79 = vld [vmem:[%s78] sm:$0x1]
    %80 = vst.msk [vmem:[#allocation2 + $0xc] sm:$0x1] %vm31, %v79
    %s81 = sld [smem:[#allocation5 + $0x86]]
    %s82 = scalar_lea.vmem %s1, %s81
    %v83 = vld [vmem:[%s82] sm:$0x1]
    %84 = vst.msk [vmem:[#allocation2 + $0xd] sm:$0x1] %vm31, %v83
    %s85 = sld [smem:[#allocation5 + $0x7]]
    %s86 = scalar_lea.vmem %s1, %s85
    %v87 = vld [vmem:[%s86] sm:$0x1]
    %88 = vst.msk [vmem:[#allocation2 + $0xe] sm:$0x1] %vm31, %v87
    %s89 = sld [smem:[#allocation5 + $0x87]]
    %s90 = scalar_lea.vmem %s1, %s89
    %v91 = vld [vmem:[%s90] sm:$0x1]
    %92 = vst.msk [vmem:[#allocation2 + $0xf] sm:$0x1] %vm31, %v91
    %v93 = vld [vmem:[#allocation2] sm:$0xff]
    %v94 = vld [vmem:[#allocation2 + $0x8] sm:$0xff]
    %v95 = vld [vmem:[%s2] sm:$0xff]
    %v96 = vld [vmem:[%s2 + $0x8] sm:$0xff]
    %v97 = vld [vmem:[%s2 + $0x10] sm:$0xff]
    %v98 = vld [vmem:[%s2 + $0x18] sm:$0xff]
    %v99 = vld [vmem:[%s4] sm:$0x1]
    %v101 = vlaneseq
    %v102 = vshrl.u32 %v101, 7
    %v103 = vsub.s32 0, %v102
    %v104 = vrot.slane %v99, %v103
    %vm106 = vcmask 261120
    %v108 = vsel %vm106, %v93, 0
    %v111 = vsel %vm106, %v94, 0
    %113 = vmatprep.subr.mxu0 0.0
    %114 = vmatpush1.msra.mxu0 %v95
    %115 = vmatprep.subr.mxu0 0.0
    %116 = vmatpush1.msra.mxu0 %v96
    %117 = vmatprep.subr.mxu0 0.0
    %118 = vmatpush1.msra.mxu0 %v97
    %119 = vmatprep.subr.mxu0 0.0
    %120 = vmatpush1.msra.mxu0 %v98
    %121 = vmatprep.subr.mxu0 0.0
    %122 = vmatpush1.msra.mxu0 0.0
    %123 = vmatprep.subr.mxu0 0.0
    %124 = vmatpush1.msra.mxu0 0.0
    %125 = vmatprep.subr.mxu0 0.0
    %126 = vmatpush1.msra.mxu0 0.0
    %127 = vmatprep.subr.mxu0 0.0
    %128 = vmatpush1.msra.mxu0 0.0
    %129 = vmatprep.subr.mxu0 0.0
    %130 = vmatpush1.msra.mxu0 0.0
    %131 = vmatprep.subr.mxu0 0.0
    %132 = vmatpush1.msra.mxu0 0.0
    %133 = vmatprep.subr.mxu0 0.0
    %134 = vmatpush1.msra.mxu0 0.0
    %135 = vmatprep.subr.mxu0 0.0
    %136 = vmatpush1.msra.mxu0 0.0
    %137 = vmatprep.subr.mxu0 0.0
    %138 = vmatpush1.msra.mxu0 0.0
    %139 = vmatprep.subr.mxu0 0.0
    %140 = vmatpush1.msra.mxu0 0.0
    %141 = vmatprep.subr.mxu0 0.0
    %142 = vmatpush1.msra.mxu0 0.0
    %143 = vmatprep.subr.mxu0 0.0
    %144 = vmatpush1.msra.mxu0 0.0
    %145 = vmatprep.subr.mxu0 0.0
    %146 = vmatpush1.msra.mxu0 0.0
    %147 = vmatprep.subr.mxu0 0.0
    %148 = vmatpush1.msra.mxu0 0.0
    %149 = vmatprep.subr.mxu0 0.0
    %150 = vmatpush1.msra.mxu0 0.0
    %151 = vmatprep.subr.mxu0 0.0
    %152 = vmatpush1.msra.mxu0 0.0
    %153 = vmatprep.subr.mxu0 0.0
    %154 = vmatpush1.msra.mxu0 0.0
    %155 = vmatprep.subr.mxu0 0.0
    %156 = vmatpush1.msra.mxu0 0.0
    %157 = vmatprep.subr.mxu0 0.0
    %158 = vmatpush1.msra.mxu0 0.0
    %159 = vmatprep.subr.mxu0 0.0
    %160 = vmatpush1.msra.mxu0 0.0
    %161 = vmatprep.subr.mxu0 0.0
    %162 = vmatpush1.msra.mxu0 0.0
    %163 = vmatprep.subr.mxu0 0.0
    %164 = vmatpush1.msra.mxu0 0.0
    %165 = vmatprep.subr.mxu0 0.0
    %166 = vmatpush1.msra.mxu0 0.0
    %167 = vmatprep.subr.mxu0 0.0
    %168 = vmatpush1.msra.mxu0 0.0
    %169 = vmatprep.subr.mxu0 0.0
    %170 = vmatpush1.msra.mxu0 0.0
    %171 = vmatprep.subr.mxu0 0.0
    %172 = vmatpush1.msra.mxu0 0.0
    %173 = vmatprep.subr.mxu0 0.0
    %174 = vmatpush1.msra.mxu0 0.0
    %175 = vmatprep.subr.mxu0 0.0
    %176 = vmatpush1.msra.mxu0 0.0
    %177 = vmatprep.mubr.f32.mxu0 0.0
    %178 = vmatmul.mubr.f32.gmra.mrb[0].mxu0 %v108
    %v179 = vpop.f32.mrb[0].mxu0
    %v180 = vadd.f32 %v104, %v179
    %v181 = vpop.f32.mrb[0].mxu0
    %182 = vmatprep.mubr.f32.mxu0 0.0
    %183 = vmatmul.mubr.f32.gmra.mrb[0].mxu0 %v111
    %v184 = vpop.f32.mrb[0].mxu0
    %v185 = vadd.f32 %v104, %v184
    %v186 = vpop.f32.mrb[0].mxu0
    %187 = vdwg.mxu0
    %188 = vst [vmem:[#allocation3] sm:$0xff] %v180
    %189 = vst [vmem:[#allocation3 + $0x8] sm:$0xff] %v185
    %v190 = vld [vmem:[%s3] sm:$0xff]
    %v191 = vld [vmem:[%s3 + $0x8] sm:$0xff]
    %v192 = vld [vmem:[%s3 + $0x10] sm:$0xff]
    %v193 = vld [vmem:[%s3 + $0x18] sm:$0xff]
    %v194 = vld [vmem:[#allocation3] sm:$0x3]
    %v196 = vsel %vm106, 0.0, 0
    %198 = vmatprep.subr.mxu0 0.0
    %199 = vmatpush1.msra.mxu0 %v190
    %200 = vmatprep.subr.mxu0 0.0
    %201 = vmatpush1.msra.mxu0 %v191
    %202 = vmatprep.subr.mxu0 0.0
    %203 = vmatpush1.msra.mxu0 %v192
    %204 = vmatprep.subr.mxu0 0.0
    %205 = vmatpush1.msra.mxu0 %v193
    %206 = vmatprep.subr.mxu0 0.0
    %207 = vmatpush1.msra.mxu0 0.0
    %208 = vmatprep.subr.mxu0 0.0
    %209 = vmatpush1.msra.mxu0 0.0
    %210 = vmatprep.subr.mxu0 0.0
    %211 = vmatpush1.msra.mxu0 0.0
    %212 = vmatprep.subr.mxu0 0.0
    %213 = vmatpush1.msra.mxu0 0.0
    %214 = vmatprep.subr.mxu0 0.0
    %215 = vmatpush1.msra.mxu0 0.0
    %216 = vmatprep.subr.mxu0 0.0
    %217 = vmatpush1.msra.mxu0 0.0
    %218 = vmatprep.subr.mxu0 0.0
    %219 = vmatpush1.msra.mxu0 0.0
    %220 = vmatprep.subr.mxu0 0.0
    %221 = vmatpush1.msra.mxu0 0.0
    %222 = vmatprep.subr.mxu0 0.0
    %223 = vmatpush1.msra.mxu0 0.0
    %224 = vmatprep.subr.mxu0 0.0
    %225 = vmatpush1.msra.mxu0 0.0
    %226 = vmatprep.subr.mxu0 0.0
    %227 = vmatpush1.msra.mxu0 0.0
    %228 = vmatprep.subr.mxu0 0.0
    %229 = vmatpush1.msra.mxu0 0.0
    %230 = vmatprep.subr.mxu0 0.0
    %231 = vmatpush1.msra.mxu0 0.0
    %232 = vmatprep.subr.mxu0 0.0
    %233 = vmatpush1.msra.mxu0 0.0
    %234 = vmatprep.subr.mxu0 0.0
    %235 = vmatpush1.msra.mxu0 0.0
    %236 = vmatprep.subr.mxu0 0.0
    %237 = vmatpush1.msra.mxu0 0.0
    %238 = vmatprep.subr.mxu0 0.0
    %239 = vmatpush1.msra.mxu0 0.0
    %240 = vmatprep.subr.mxu0 0.0
    %241 = vmatpush1.msra.mxu0 0.0
    %242 = vmatprep.subr.mxu0 0.0
    %243 = vmatpush1.msra.mxu0 0.0
    %244 = vmatprep.subr.mxu0 0.0
    %245 = vmatpush1.msra.mxu0 0.0
    %246 = vmatprep.subr.mxu0 0.0
    %247 = vmatpush1.msra.mxu0 0.0
    %248 = vmatprep.subr.mxu0 0.0
    %249 = vmatpush1.msra.mxu0 0.0
    %250 = vmatprep.subr.mxu0 0.0
    %251 = vmatpush1.msra.mxu0 0.0
    %252 = vmatprep.subr.mxu0 0.0
    %253 = vmatpush1.msra.mxu0 0.0
    %254 = vmatprep.subr.mxu0 0.0
    %255 = vmatpush1.msra.mxu0 0.0
    %256 = vmatprep.subr.mxu0 0.0
    %257 = vmatpush1.msra.mxu0 0.0
    %258 = vmatprep.subr.mxu0 0.0
    %259 = vmatpush1.msra.mxu0 0.0
    %260 = vmatprep.subr.mxu0 0.0
    %261 = vmatpush1.msra.mxu0 0.0
    %262 = vmatprep.mubr.f32.mxu0 0.0
    %263 = vmatmul.mubr.f32.gmra.mrb[0].mxu0 %v196
    %v264 = vpop.f32.mrb[0].mxu0
    %v265 = vadd.f32 0.0, %v264
    %v266 = vpop.f32.mrb[0].mxu0
    %267 = vdwg.mxu0
    %v268 = vadd.f32 %v194, %v265
    %v269 = vxor.u32 %v268, 2147483648
    %v270 = vmul.f32 %v269, 1.442695
    %v271 = vpow.pop %v270
    %v272 = vadd.f32 %v271, 1.0
    %v273 = vrcp.pop %v272
    %v274 = vmul.f32 1.0, %v273
    %v275 = vtanh.pop %v268
    %v276 = vmul.f32 %v274, 0.0
    %278 = vrot.lane.b32.xlu0 %v275, 64
    %v279 = vpop.permute.xlu0 %278
    %v281 = vmul.f32 %v274, %v279
    %283 = vrot.lane.b32.xlu0 %v281, 32
    %v284 = vpop.permute.xlu0 %283
    %v286 = vadd.f32 %v276, %v284
    %v287 = vtanh.pop %v286
    %289 = vrot.lane.b32.xlu0 %v287, 64
    %v290 = vpop.permute.xlu0 %289
    %v292 = vmul.f32 %v274, %v290
    %s293 = scalar_lea.vmem [#allocation3], 2
    %v294 = vld [vmem:[%s293] sm:$0x3]
    %296 = vrot.lane.b32.xlu0 %v292, 32
    %v297 = vpop.permute.xlu0 %296
    %v298 = vsel %vm106, %v297, 0
    %300 = vmatprep.subr.mxu0 0.0
    %301 = vmatpush1.msra.mxu0 %v190
    %302 = vmatprep.subr.mxu0 0.0
    %303 = vmatpush1.msra.mxu0 %v191
    %304 = vmatprep.subr.mxu0 0.0
    %305 = vmatpush1.msra.mxu0 %v192
    %306 = vmatprep.subr.mxu0 0.0
    %307 = vmatpush1.msra.mxu0 %v193
    %308 = vmatprep.subr.mxu0 0.0
    %309 = vmatpush1.msra.mxu0 0.0
    %310 = vmatprep.subr.mxu0 0.0
    %311 = vmatpush1.msra.mxu0 0.0
    %312 = vmatprep.subr.mxu0 0.0
    %313 = vmatpush1.msra.mxu0 0.0
    %314 = vmatprep.subr.mxu0 0.0
    %315 = vmatpush1.msra.mxu0 0.0
    %316 = vmatprep.subr.mxu0 0.0
    %317 = vmatpush1.msra.mxu0 0.0
    %318 = vmatprep.subr.mxu0 0.0
    %319 = vmatpush1.msra.mxu0 0.0
    %320 = vmatprep.subr.mxu0 0.0
    %321 = vmatpush1.msra.mxu0 0.0
    %322 = vmatprep.subr.mxu0 0.0
    %323 = vmatpush1.msra.mxu0 0.0
    %324 = vmatprep.subr.mxu0 0.0
    %325 = vmatpush1.msra.mxu0 0.0
    %326 = vmatprep.subr.mxu0 0.0
    %327 = vmatpush1.msra.mxu0 0.0
    %328 = vmatprep.subr.mxu0 0.0
    %329 = vmatpush1.msra.mxu0 0.0
    %330 = vmatprep.subr.mxu0 0.0
    %331 = vmatpush1.msra.mxu0 0.0
    %332 = vmatprep.subr.mxu0 0.0
    %333 = vmatpush1.msra.mxu0 0.0
    %334 = vmatprep.subr.mxu0 0.0
    %335 = vmatpush1.msra.mxu0 0.0
    %336 = vmatprep.subr.mxu0 0.0
    %337 = vmatpush1.msra.mxu0 0.0
    %338 = vmatprep.subr.mxu0 0.0
    %339 = vmatpush1.msra.mxu0 0.0
    %340 = vmatprep.subr.mxu0 0.0
    %341 = vmatpush1.msra.mxu0 0.0
    %342 = vmatprep.subr.mxu0 0.0
    %343 = vmatpush1.msra.mxu0 0.0
    %344 = vmatprep.subr.mxu0 0.0
    %345 = vmatpush1.msra.mxu0 0.0
    %346 = vmatprep.subr.mxu0 0.0
    %347 = vmatpush1.msra.mxu0 0.0
    %348 = vmatprep.subr.mxu0 0.0
    %349 = vmatpush1.msra.mxu0 0.0
    %350 = vmatprep.subr.mxu0 0.0
    %351 = vmatpush1.msra.mxu0 0.0
    %352 = vmatprep.subr.mxu0 0.0
    %353 = vmatpush1.msra.mxu0 0.0
    %354 = vmatprep.subr.mxu0 0.0
    %355 = vmatpush1.msra.mxu0 0.0
    %356 = vmatprep.subr.mxu0 0.0
    %357 = vmatpush1.msra.mxu0 0.0
    %358 = vmatprep.subr.mxu0 0.0
    %359 = vmatpush1.msra.mxu0 0.0
    %360 = vmatprep.subr.mxu0 0.0
    %361 = vmatpush1.msra.mxu0 0.0
    %362 = vmatprep.subr.mxu0 0.0
    %363 = vmatpush1.msra.mxu0 0.0
    %364 = vmatprep.mubr.f32.mxu0 0.0
    %365 = vmatmul.mubr.f32.gmra.mrb[0].mxu0 %v298
    %v366 = vpop.f32.mrb[0].mxu0
    %v367 = vadd.f32 0.0, %v366
    %v368 = vpop.f32.mrb[0].mxu0
    %369 = vdwg.mxu0
    %v370 = vadd.f32 %v294, %v367
    %v371 = vxor.u32 %v370, 2147483648
    %v372 = vmul.f32 %v371, 1.442695
    %v373 = vpow.pop %v372
    %v374 = vadd.f32 %v373, 1.0
    %v375 = vrcp.pop %v374
    %v376 = vmul.f32 1.0, %v375
    %v377 = vtanh.pop %v370
    %v378 = vmul.f32 %v376, %v286
    %380 = vrot.lane.b32.xlu0 %v377, 64
    %v381 = vpop.permute.xlu0 %380
    %v383 = vmul.f32 %v376, %v381
    %385 = vrot.lane.b32.xlu0 %v383, 32
    %v386 = vpop.permute.xlu0 %385
    %v388 = vadd.f32 %v378, %v386
    %v389 = vtanh.pop %v388
    %391 = vrot.lane.b32.xlu0 %v389, 64
    %v392 = vpop.permute.xlu0 %391
    %v394 = vmul.f32 %v376, %v392
    %s395 = scalar_lea.vmem [#allocation3], 4
    %v396 = vld [vmem:[%s395] sm:$0x3]
    %398 = vrot.lane.b32.xlu0 %v394, 32
    %v399 = vpop.permute.xlu0 %398
    %v400 = vsel %vm106, %v399, 0
    %402 = vmatprep.subr.mxu0 0.0
    %403 = vmatpush1.msra.mxu0 %v190
    %404 = vmatprep.subr.mxu0 0.0
    %405 = vmatpush1.msra.mxu0 %v191
    %406 = vmatprep.subr.mxu0 0.0
    %407 = vmatpush1.msra.mxu0 %v192
    %408 = vmatprep.subr.mxu0 0.0
    %409 = vmatpush1.msra.mxu0 %v193
    %410 = vmatprep.subr.mxu0 0.0
    %411 = vmatpush1.msra.mxu0 0.0
    %412 = vmatprep.subr.mxu0 0.0
    %413 = vmatpush1.msra.mxu0 0.0
    %414 = vmatprep.subr.mxu0 0.0
    %415 = vmatpush1.msra.mxu0 0.0
    %416 = vmatprep.subr.mxu0 0.0
    %417 = vmatpush1.msra.mxu0 0.0
    %418 = vmatprep.subr.mxu0 0.0
    %419 = vmatpush1.msra.mxu0 0.0
    %420 = vmatprep.subr.mxu0 0.0
    %421 = vmatpush1.msra.mxu0 0.0
    %422 = vmatprep.subr.mxu0 0.0
    %423 = vmatpush1.msra.mxu0 0.0
    %424 = vmatprep.subr.mxu0 0.0
    %425 = vmatpush1.msra.mxu0 0.0
    %426 = vmatprep.subr.mxu0 0.0
    %427 = vmatpush1.msra.mxu0 0.0
    %428 = vmatprep.subr.mxu0 0.0
    %429 = vmatpush1.msra.mxu0 0.0
    %430 = vmatprep.subr.mxu0 0.0
    %431 = vmatpush1.msra.mxu0 0.0
    %432 = vmatprep.subr.mxu0 0.0
    %433 = vmatpush1.msra.mxu0 0.0
    %434 = vmatprep.subr.mxu0 0.0
    %435 = vmatpush1.msra.mxu0 0.0
    %436 = vmatprep.subr.mxu0 0.0
    %437 = vmatpush1.msra.mxu0 0.0
    %438 = vmatprep.subr.mxu0 0.0
    %439 = vmatpush1.msra.mxu0 0.0
    %440 = vmatprep.subr.mxu0 0.0
    %441 = vmatpush1.msra.mxu0 0.0
    %442 = vmatprep.subr.mxu0 0.0
    %443 = vmatpush1.msra.mxu0 0.0
    %444 = vmatprep.subr.mxu0 0.0
    %445 = vmatpush1.msra.mxu0 0.0
    %446 = vmatprep.subr.mxu0 0.0
    %447 = vmatpush1.msra.mxu0 0.0
    %448 = vmatprep.subr.mxu0 0.0
    %449 = vmatpush1.msra.mxu0 0.0
    %450 = vmatprep.subr.mxu0 0.0
    %451 = vmatpush1.msra.mxu0 0.0
    %452 = vmatprep.subr.mxu0 0.0
    %453 = vmatpush1.msra.mxu0 0.0
    %454 = vmatprep.subr.mxu0 0.0
    %455 = vmatpush1.msra.mxu0 0.0
    %456 = vmatprep.subr.mxu0 0.0
    %457 = vmatpush1.msra.mxu0 0.0
    %458 = vmatprep.subr.mxu0 0.0
    %459 = vmatpush1.msra.mxu0 0.0
    %460 = vmatprep.subr.mxu0 0.0
    %461 = vmatpush1.msra.mxu0 0.0
    %462 = vmatprep.subr.mxu0 0.0
    %463 = vmatpush1.msra.mxu0 0.0
    %464 = vmatprep.subr.mxu0 0.0
    %465 = vmatpush1.msra.mxu0 0.0
    %466 = vmatprep.mubr.f32.mxu0 0.0
    %467 = vmatmul.mubr.f32.gmra.mrb[0].mxu0 %v400
    %v468 = vpop.f32.mrb[0].mxu0
    %v469 = vadd.f32 0.0, %v468
    %v470 = vpop.f32.mrb[0].mxu0
    %471 = vdwg.mxu0
    %v472 = vadd.f32 %v396, %v469
    %v473 = vxor.u32 %v472, 2147483648
    %v474 = vmul.f32 %v473, 1.442695
    %v475 = vpow.pop %v474
    %v476 = vadd.f32 %v475, 1.0
    %v477 = vrcp.pop %v476
    %v478 = vmul.f32 1.0, %v477
    %v479 = vtanh.pop %v472
    %v480 = vmul.f32 %v478, %v388
    %482 = vrot.lane.b32.xlu0 %v479, 64
    %v483 = vpop.permute.xlu0 %482
    %v485 = vmul.f32 %v478, %v483
    %487 = vrot.lane.b32.xlu0 %v485, 32
    %v488 = vpop.permute.xlu0 %487
    %v490 = vadd.f32 %v480, %v488
    %v491 = vtanh.pop %v490
    %493 = vrot.lane.b32.xlu0 %v491, 64
    %v494 = vpop.permute.xlu0 %493
    %v496 = vmul.f32 %v478, %v494
    %s497 = scalar_lea.vmem [#allocation3], 6
    %v498 = vld [vmem:[%s497] sm:$0x3]
    %500 = vrot.lane.b32.xlu0 %v496, 32
    %v501 = vpop.permute.xlu0 %500
    %v502 = vsel %vm106, %v501, 0
    %504 = vmatprep.subr.mxu0 0.0
    %505 = vmatpush1.msra.mxu0 %v190
    %506 = vmatprep.subr.mxu0 0.0
    %507 = vmatpush1.msra.mxu0 %v191
    %508 = vmatprep.subr.mxu0 0.0
    %509 = vmatpush1.msra.mxu0 %v192
    %510 = vmatprep.subr.mxu0 0.0
    %511 = vmatpush1.msra.mxu0 %v193
    %512 = vmatprep.subr.mxu0 0.0
    %513 = vmatpush1.msra.mxu0 0.0
    %514 = vmatprep.subr.mxu0 0.0
    %515 = vmatpush1.msra.mxu0 0.0
    %516 = vmatprep.subr.mxu0 0.0
    %517 = vmatpush1.msra.mxu0 0.0
    %518 = vmatprep.subr.mxu0 0.0
    %519 = vmatpush1.msra.mxu0 0.0
    %520 = vmatprep.subr.mxu0 0.0
    %521 = vmatpush1.msra.mxu0 0.0
    %522 = vmatprep.subr.mxu0 0.0
    %523 = vmatpush1.msra.mxu0 0.0
    %524 = vmatprep.subr.mxu0 0.0
    %525 = vmatpush1.msra.mxu0 0.0
    %526 = vmatprep.subr.mxu0 0.0
    %527 = vmatpush1.msra.mxu0 0.0
    %528 = vmatprep.subr.mxu0 0.0
    %529 = vmatpush1.msra.mxu0 0.0
    %530 = vmatprep.subr.mxu0 0.0
    %531 = vmatpush1.msra.mxu0 0.0
    %532 = vmatprep.subr.mxu0 0.0
    %533 = vmatpush1.msra.mxu0 0.0
    %534 = vmatprep.subr.mxu0 0.0
    %535 = vmatpush1.msra.mxu0 0.0
    %536 = vmatprep.subr.mxu0 0.0
    %537 = vmatpush1.msra.mxu0 0.0
    %538 = vmatprep.subr.mxu0 0.0
    %539 = vmatpush1.msra.mxu0 0.0
    %540 = vmatprep.subr.mxu0 0.0
    %541 = vmatpush1.msra.mxu0 0.0
    %542 = vmatprep.subr.mxu0 0.0
    %543 = vmatpush1.msra.mxu0 0.0
    %544 = vmatprep.subr.mxu0 0.0
    %545 = vmatpush1.msra.mxu0 0.0
    %546 = vmatprep.subr.mxu0 0.0
    %547 = vmatpush1.msra.mxu0 0.0
    %548 = vmatprep.subr.mxu0 0.0
    %549 = vmatpush1.msra.mxu0 0.0
    %550 = vmatprep.subr.mxu0 0.0
    %551 = vmatpush1.msra.mxu0 0.0
    %552 = vmatprep.subr.mxu0 0.0
    %553 = vmatpush1.msra.mxu0 0.0
    %554 = vmatprep.subr.mxu0 0.0
    %555 = vmatpush1.msra.mxu0 0.0
    %556 = vmatprep.subr.mxu0 0.0
    %557 = vmatpush1.msra.mxu0 0.0
    %558 = vmatprep.subr.mxu0 0.0
    %559 = vmatpush1.msra.mxu0 0.0
    %560 = vmatprep.subr.mxu0 0.0
    %561 = vmatpush1.msra.mxu0 0.0
    %562 = vmatprep.subr.mxu0 0.0
    %563 = vmatpush1.msra.mxu0 0.0
    %564 = vmatprep.subr.mxu0 0.0
    %565 = vmatpush1.msra.mxu0 0.0
    %566 = vmatprep.subr.mxu0 0.0
    %567 = vmatpush1.msra.mxu0 0.0
    %568 = vmatprep.mubr.f32.mxu0 0.0
    %569 = vmatmul.mubr.f32.gmra.mrb[0].mxu0 %v502
    %v570 = vpop.f32.mrb[0].mxu0
    %v571 = vadd.f32 0.0, %v570
    %v572 = vpop.f32.mrb[0].mxu0
    %573 = vdwg.mxu0
    %v574 = vadd.f32 %v498, %v571
    %v575 = vxor.u32 %v574, 2147483648
    %v576 = vmul.f32 %v575, 1.442695
    %v577 = vpow.pop %v576
    %v578 = vadd.f32 %v577, 1.0
    %v579 = vrcp.pop %v578
    %v580 = vmul.f32 1.0, %v579
    %v581 = vtanh.pop %v574
    %v582 = vmul.f32 %v580, %v490
    %584 = vrot.lane.b32.xlu0 %v581, 64
    %v585 = vpop.permute.xlu0 %584
    %v587 = vmul.f32 %v580, %v585
    %589 = vrot.lane.b32.xlu0 %v587, 32
    %v590 = vpop.permute.xlu0 %589
    %v592 = vadd.f32 %v582, %v590
    %v593 = vtanh.pop %v592
    %595 = vrot.lane.b32.xlu0 %v593, 64
    %v596 = vpop.permute.xlu0 %595
    %v598 = vmul.f32 %v580, %v596
    %s599 = scalar_lea.vmem [#allocation3], 8
    %v600 = vld [vmem:[%s599] sm:$0x3]
    %602 = vrot.lane.b32.xlu0 %v598, 32
    %v603 = vpop.permute.xlu0 %602
    %v604 = vsel %vm106, %v603, 0
    %606 = vmatprep.subr.mxu0 0.0
    %607 = vmatpush1.msra.mxu0 %v190
    %608 = vmatprep.subr.mxu0 0.0
    %609 = vmatpush1.msra.mxu0 %v191
    %610 = vmatprep.subr.mxu0 0.0
    %611 = vmatpush1.msra.mxu0 %v192
    %612 = vmatprep.subr.mxu0 0.0
    %613 = vmatpush1.msra.mxu0 %v193
    %614 = vmatprep.subr.mxu0 0.0
    %615 = vmatpush1.msra.mxu0 0.0
    %616 = vmatprep.subr.mxu0 0.0
    %617 = vmatpush1.msra.mxu0 0.0
    %618 = vmatprep.subr.mxu0 0.0
    %619 = vmatpush1.msra.mxu0 0.0
    %620 = vmatprep.subr.mxu0 0.0
    %621 = vmatpush1.msra.mxu0 0.0
    %622 = vmatprep.subr.mxu0 0.0
    %623 = vmatpush1.msra.mxu0 0.0
    %624 = vmatprep.subr.mxu0 0.0
    %625 = vmatpush1.msra.mxu0 0.0
    %626 = vmatprep.subr.mxu0 0.0
    %627 = vmatpush1.msra.mxu0 0.0
    %628 = vmatprep.subr.mxu0 0.0
    %629 = vmatpush1.msra.mxu0 0.0
    %630 = vmatprep.subr.mxu0 0.0
    %631 = vmatpush1.msra.mxu0 0.0
    %632 = vmatprep.subr.mxu0 0.0
    %633 = vmatpush1.msra.mxu0 0.0
    %634 = vmatprep.subr.mxu0 0.0
    %635 = vmatpush1.msra.mxu0 0.0
    %636 = vmatprep.subr.mxu0 0.0
    %637 = vmatpush1.msra.mxu0 0.0
    %638 = vmatprep.subr.mxu0 0.0
    %639 = vmatpush1.msra.mxu0 0.0
    %640 = vmatprep.subr.mxu0 0.0
    %641 = vmatpush1.msra.mxu0 0.0
    %642 = vmatprep.subr.mxu0 0.0
    %643 = vmatpush1.msra.mxu0 0.0
    %644 = vmatprep.subr.mxu0 0.0
    %645 = vmatpush1.msra.mxu0 0.0
    %646 = vmatprep.subr.mxu0 0.0
    %647 = vmatpush1.msra.mxu0 0.0
    %648 = vmatprep.subr.mxu0 0.0
    %649 = vmatpush1.msra.mxu0 0.0
    %650 = vmatprep.subr.mxu0 0.0
    %651 = vmatpush1.msra.mxu0 0.0
    %652 = vmatprep.subr.mxu0 0.0
    %653 = vmatpush1.msra.mxu0 0.0
    %654 = vmatprep.subr.mxu0 0.0
    %655 = vmatpush1.msra.mxu0 0.0
    %656 = vmatprep.subr.mxu0 0.0
    %657 = vmatpush1.msra.mxu0 0.0
    %658 = vmatprep.subr.mxu0 0.0
    %659 = vmatpush1.msra.mxu0 0.0
    %660 = vmatprep.subr.mxu0 0.0
    %661 = vmatpush1.msra.mxu0 0.0
    %662 = vmatprep.subr.mxu0 0.0
    %663 = vmatpush1.msra.mxu0 0.0
    %664 = vmatprep.subr.mxu0 0.0
    %665 = vmatpush1.msra.mxu0 0.0
    %666 = vmatprep.subr.mxu0 0.0
    %667 = vmatpush1.msra.mxu0 0.0
    %668 = vmatprep.subr.mxu0 0.0
    %669 = vmatpush1.msra.mxu0 0.0
    %670 = vmatprep.mubr.f32.mxu0 0.0
    %671 = vmatmul.mubr.f32.gmra.mrb[0].mxu0 %v604
    %v672 = vpop.f32.mrb[0].mxu0
    %v673 = vadd.f32 0.0, %v672
    %v674 = vpop.f32.mrb[0].mxu0
    %675 = vdwg.mxu0
    %v676 = vadd.f32 %v600, %v673
    %v677 = vxor.u32 %v676, 2147483648
    %v678 = vmul.f32 %v677, 1.442695
    %v679 = vpow.pop %v678
    %v680 = vadd.f32 %v679, 1.0
    %v681 = vrcp.pop %v680
    %v682 = vmul.f32 1.0, %v681
    %v683 = vtanh.pop %v676
    %v684 = vmul.f32 %v682, %v592
    %686 = vrot.lane.b32.xlu0 %v683, 64
    %v687 = vpop.permute.xlu0 %686
    %v689 = vmul.f32 %v682, %v687
    %691 = vrot.lane.b32.xlu0 %v689, 32
    %v692 = vpop.permute.xlu0 %691
    %v694 = vadd.f32 %v684, %v692
    %v695 = vtanh.pop %v694
    %697 = vrot.lane.b32.xlu0 %v695, 64
    %v698 = vpop.permute.xlu0 %697
    %v700 = vmul.f32 %v682, %v698
    %s701 = scalar_lea.vmem [#allocation3], 10
    %v702 = vld [vmem:[%s701] sm:$0x3]
    %704 = vrot.lane.b32.xlu0 %v700, 32
    %v705 = vpop.permute.xlu0 %704
    %v706 = vsel %vm106, %v705, 0
    %708 = vmatprep.subr.mxu0 0.0
    %709 = vmatpush1.msra.mxu0 %v190
    %710 = vmatprep.subr.mxu0 0.0
    %711 = vmatpush1.msra.mxu0 %v191
    %712 = vmatprep.subr.mxu0 0.0
    %713 = vmatpush1.msra.mxu0 %v192
    %714 = vmatprep.subr.mxu0 0.0
    %715 = vmatpush1.msra.mxu0 %v193
    %716 = vmatprep.subr.mxu0 0.0
    %717 = vmatpush1.msra.mxu0 0.0
    %718 = vmatprep.subr.mxu0 0.0
    %719 = vmatpush1.msra.mxu0 0.0
    %720 = vmatprep.subr.mxu0 0.0
    %721 = vmatpush1.msra.mxu0 0.0
    %722 = vmatprep.subr.mxu0 0.0
    %723 = vmatpush1.msra.mxu0 0.0
    %724 = vmatprep.subr.mxu0 0.0
    %725 = vmatpush1.msra.mxu0 0.0
    %726 = vmatprep.subr.mxu0 0.0
    %727 = vmatpush1.msra.mxu0 0.0
    %728 = vmatprep.subr.mxu0 0.0
    %729 = vmatpush1.msra.mxu0 0.0
    %730 = vmatprep.subr.mxu0 0.0
    %731 = vmatpush1.msra.mxu0 0.0
    %732 = vmatprep.subr.mxu0 0.0
    %733 = vmatpush1.msra.mxu0 0.0
    %734 = vmatprep.subr.mxu0 0.0
    %735 = vmatpush1.msra.mxu0 0.0
    %736 = vmatprep.subr.mxu0 0.0
    %737 = vmatpush1.msra.mxu0 0.0
    %738 = vmatprep.subr.mxu0 0.0
    %739 = vmatpush1.msra.mxu0 0.0
    %740 = vmatprep.subr.mxu0 0.0
    %741 = vmatpush1.msra.mxu0 0.0
    %742 = vmatprep.subr.mxu0 0.0
    %743 = vmatpush1.msra.mxu0 0.0
    %744 = vmatprep.subr.mxu0 0.0
    %745 = vmatpush1.msra.mxu0 0.0
    %746 = vmatprep.subr.mxu0 0.0
    %747 = vmatpush1.msra.mxu0 0.0
    %748 = vmatprep.subr.mxu0 0.0
    %749 = vmatpush1.msra.mxu0 0.0
    %750 = vmatprep.subr.mxu0 0.0
    %751 = vmatpush1.msra.mxu0 0.0
    %752 = vmatprep.subr.mxu0 0.0
    %753 = vmatpush1.msra.mxu0 0.0
    %754 = vmatprep.subr.mxu0 0.0
    %755 = vmatpush1.msra.mxu0 0.0
    %756 = vmatprep.subr.mxu0 0.0
    %757 = vmatpush1.msra.mxu0 0.0
    %758 = vmatprep.subr.mxu0 0.0
    %759 = vmatpush1.msra.mxu0 0.0
    %760 = vmatprep.subr.mxu0 0.0
    %761 = vmatpush1.msra.mxu0 0.0
    %762 = vmatprep.subr.mxu0 0.0
    %763 = vmatpush1.msra.mxu0 0.0
    %764 = vmatprep.subr.mxu0 0.0
    %765 = vmatpush1.msra.mxu0 0.0
    %766 = vmatprep.subr.mxu0 0.0
    %767 = vmatpush1.msra.mxu0 0.0
    %768 = vmatprep.subr.mxu0 0.0
    %769 = vmatpush1.msra.mxu0 0.0
    %770 = vmatprep.subr.mxu0 0.0
    %771 = vmatpush1.msra.mxu0 0.0
    %772 = vmatprep.mubr.f32.mxu0 0.0
    %773 = vmatmul.mubr.f32.gmra.mrb[0].mxu0 %v706
    %v774 = vpop.f32.mrb[0].mxu0
    %v775 = vadd.f32 0.0, %v774
    %v776 = vpop.f32.mrb[0].mxu0
    %777 = vdwg.mxu0
    %v778 = vadd.f32 %v702, %v775
    %v779 = vxor.u32 %v778, 2147483648
    %v780 = vmul.f32 %v779, 1.442695
    %v781 = vpow.pop %v780
    %v782 = vadd.f32 %v781, 1.0
    %v783 = vrcp.pop %v782
    %v784 = vmul.f32 1.0, %v783
    %v785 = vtanh.pop %v778
    %v786 = vmul.f32 %v784, %v694
    %788 = vrot.lane.b32.xlu0 %v785, 64
    %v789 = vpop.permute.xlu0 %788
    %v791 = vmul.f32 %v784, %v789
    %793 = vrot.lane.b32.xlu0 %v791, 32
    %v794 = vpop.permute.xlu0 %793
    %v796 = vadd.f32 %v786, %v794
    %v797 = vtanh.pop %v796
    %799 = vrot.lane.b32.xlu0 %v797, 64
    %v800 = vpop.permute.xlu0 %799
    %v802 = vmul.f32 %v784, %v800
    %s803 = scalar_lea.vmem [#allocation3], 12
    %v804 = vld [vmem:[%s803] sm:$0x3]
    %806 = vrot.lane.b32.xlu0 %v802, 32
    %v807 = vpop.permute.xlu0 %806
    %v808 = vsel %vm106, %v807, 0
    %810 = vmatprep.subr.mxu0 0.0
    %811 = vmatpush1.msra.mxu0 %v190
    %812 = vmatprep.subr.mxu0 0.0
    %813 = vmatpush1.msra.mxu0 %v191
    %814 = vmatprep.subr.mxu0 0.0
    %815 = vmatpush1.msra.mxu0 %v192
    %816 = vmatprep.subr.mxu0 0.0
    %817 = vmatpush1.msra.mxu0 %v193
    %818 = vmatprep.subr.mxu0 0.0
    %819 = vmatpush1.msra.mxu0 0.0
    %820 = vmatprep.subr.mxu0 0.0
    %821 = vmatpush1.msra.mxu0 0.0
    %822 = vmatprep.subr.mxu0 0.0
    %823 = vmatpush1.msra.mxu0 0.0
    %824 = vmatprep.subr.mxu0 0.0
    %825 = vmatpush1.msra.mxu0 0.0
    %826 = vmatprep.subr.mxu0 0.0
    %827 = vmatpush1.msra.mxu0 0.0
    %828 = vmatprep.subr.mxu0 0.0
    %829 = vmatpush1.msra.mxu0 0.0
    %830 = vmatprep.subr.mxu0 0.0
    %831 = vmatpush1.msra.mxu0 0.0
    %832 = vmatprep.subr.mxu0 0.0
    %833 = vmatpush1.msra.mxu0 0.0
    %834 = vmatprep.subr.mxu0 0.0
    %835 = vmatpush1.msra.mxu0 0.0
    %836 = vmatprep.subr.mxu0 0.0
    %837 = vmatpush1.msra.mxu0 0.0
    %838 = vmatprep.subr.mxu0 0.0
    %839 = vmatpush1.msra.mxu0 0.0
    %840 = vmatprep.subr.mxu0 0.0
    %841 = vmatpush1.msra.mxu0 0.0
    %842 = vmatprep.subr.mxu0 0.0
    %843 = vmatpush1.msra.mxu0 0.0
    %844 = vmatprep.subr.mxu0 0.0
    %845 = vmatpush1.msra.mxu0 0.0
    %846 = vmatprep.subr.mxu0 0.0
    %847 = vmatpush1.msra.mxu0 0.0
    %848 = vmatprep.subr.mxu0 0.0
    %849 = vmatpush1.msra.mxu0 0.0
    %850 = vmatprep.subr.mxu0 0.0
    %851 = vmatpush1.msra.mxu0 0.0
    %852 = vmatprep.subr.mxu0 0.0
    %853 = vmatpush1.msra.mxu0 0.0
    %854 = vmatprep.subr.mxu0 0.0
    %855 = vmatpush1.msra.mxu0 0.0
    %856 = vmatprep.subr.mxu0 0.0
    %857 = vmatpush1.msra.mxu0 0.0
    %858 = vmatprep.subr.mxu0 0.0
    %859 = vmatpush1.msra.mxu0 0.0
    %860 = vmatprep.subr.mxu0 0.0
    %861 = vmatpush1.msra.mxu0 0.0
    %862 = vmatprep.subr.mxu0 0.0
    %863 = vmatpush1.msra.mxu0 0.0
    %864 = vmatprep.subr.mxu0 0.0
    %865 = vmatpush1.msra.mxu0 0.0
    %866 = vmatprep.subr.mxu0 0.0
    %867 = vmatpush1.msra.mxu0 0.0
    %868 = vmatprep.subr.mxu0 0.0
    %869 = vmatpush1.msra.mxu0 0.0
    %870 = vmatprep.subr.mxu0 0.0
    %871 = vmatpush1.msra.mxu0 0.0
    %872 = vmatprep.subr.mxu0 0.0
    %873 = vmatpush1.msra.mxu0 0.0
    %874 = vmatprep.mubr.f32.mxu0 0.0
    %875 = vmatmul.mubr.f32.gmra.mrb[0].mxu0 %v808
    %v876 = vpop.f32.mrb[0].mxu0
    %v877 = vadd.f32 0.0, %v876
    %v878 = vpop.f32.mrb[0].mxu0
    %879 = vdwg.mxu0
    %v880 = vadd.f32 %v804, %v877
    %v881 = vxor.u32 %v880, 2147483648
    %v882 = vmul.f32 %v881, 1.442695
    %v883 = vpow.pop %v882
    %v884 = vadd.f32 %v883, 1.0
    %v885 = vrcp.pop %v884
    %v886 = vmul.f32 1.0, %v885
    %v887 = vtanh.pop %v880
    %v888 = vmul.f32 %v886, %v796
    %890 = vrot.lane.b32.xlu0 %v887, 64
    %v891 = vpop.permute.xlu0 %890
    %v893 = vmul.f32 %v886, %v891
    %895 = vrot.lane.b32.xlu0 %v893, 32
    %v896 = vpop.permute.xlu0 %895
    %v898 = vadd.f32 %v888, %v896
    %v899 = vtanh.pop %v898
    %901 = vrot.lane.b32.xlu0 %v899, 64
    %v902 = vpop.permute.xlu0 %901
    %v904 = vmul.f32 %v886, %v902
    %s905 = scalar_lea.vmem [#allocation3], 14
    %v906 = vld [vmem:[%s905] sm:$0x3]
    %908 = vrot.lane.b32.xlu0 %v904, 32
    %v909 = vpop.permute.xlu0 %908
    %v910 = vsel %vm106, %v909, 0
    %912 = vmatprep.subr.mxu0 0.0
    %913 = vmatpush1.msra.mxu0 %v190
    %914 = vmatprep.subr.mxu0 0.0
    %915 = vmatpush1.msra.mxu0 %v191
    %916 = vmatprep.subr.mxu0 0.0
    %917 = vmatpush1.msra.mxu0 %v192
    %918 = vmatprep.subr.mxu0 0.0
    %919 = vmatpush1.msra.mxu0 %v193
    %920 = vmatprep.subr.mxu0 0.0
    %921 = vmatpush1.msra.mxu0 0.0
    %922 = vmatprep.subr.mxu0 0.0
    %923 = vmatpush1.msra.mxu0 0.0
    %924 = vmatprep.subr.mxu0 0.0
    %925 = vmatpush1.msra.mxu0 0.0
    %926 = vmatprep.subr.mxu0 0.0
    %927 = vmatpush1.msra.mxu0 0.0
    %928 = vmatprep.subr.mxu0 0.0
    %929 = vmatpush1.msra.mxu0 0.0
    %930 = vmatprep.subr.mxu0 0.0
    %931 = vmatpush1.msra.mxu0 0.0
    %932 = vmatprep.subr.mxu0 0.0
    %933 = vmatpush1.msra.mxu0 0.0
    %934 = vmatprep.subr.mxu0 0.0
    %935 = vmatpush1.msra.mxu0 0.0
    %936 = vmatprep.subr.mxu0 0.0
    %937 = vmatpush1.msra.mxu0 0.0
    %938 = vmatprep.subr.mxu0 0.0
    %939 = vmatpush1.msra.mxu0 0.0
    %940 = vmatprep.subr.mxu0 0.0
    %941 = vmatpush1.msra.mxu0 0.0
    %942 = vmatprep.subr.mxu0 0.0
    %943 = vmatpush1.msra.mxu0 0.0
    %944 = vmatprep.subr.mxu0 0.0
    %945 = vmatpush1.msra.mxu0 0.0
    %946 = vmatprep.subr.mxu0 0.0
    %947 = vmatpush1.msra.mxu0 0.0
    %948 = vmatprep.subr.mxu0 0.0
    %949 = vmatpush1.msra.mxu0 0.0
    %950 = vmatprep.subr.mxu0 0.0
    %951 = vmatpush1.msra.mxu0 0.0
    %952 = vmatprep.subr.mxu0 0.0
    %953 = vmatpush1.msra.mxu0 0.0
    %954 = vmatprep.subr.mxu0 0.0
    %955 = vmatpush1.msra.mxu0 0.0
    %956 = vmatprep.subr.mxu0 0.0
    %957 = vmatpush1.msra.mxu0 0.0
    %958 = vmatprep.subr.mxu0 0.0
    %959 = vmatpush1.msra.mxu0 0.0
    %960 = vmatprep.subr.mxu0 0.0
    %961 = vmatpush1.msra.mxu0 0.0
    %962 = vmatprep.subr.mxu0 0.0
    %963 = vmatpush1.msra.mxu0 0.0
    %964 = vmatprep.subr.mxu0 0.0
    %965 = vmatpush1.msra.mxu0 0.0
    %966 = vmatprep.subr.mxu0 0.0
    %967 = vmatpush1.msra.mxu0 0.0
    %968 = vmatprep.subr.mxu0 0.0
    %969 = vmatpush1.msra.mxu0 0.0
    %970 = vmatprep.subr.mxu0 0.0
    %971 = vmatpush1.msra.mxu0 0.0
    %972 = vmatprep.subr.mxu0 0.0
    %973 = vmatpush1.msra.mxu0 0.0
    %974 = vmatprep.subr.mxu0 0.0
    %975 = vmatpush1.msra.mxu0 0.0
    %976 = vmatprep.mubr.f32.mxu0 0.0
    %977 = vmatmul.mubr.f32.gmra.mrb[0].mxu0 %v910
    %v978 = vpop.f32.mrb[0].mxu0
    %v979 = vadd.f32 0.0, %v978
    %v980 = vpop.f32.mrb[0].mxu0
    %981 = vdwg.mxu0
    %v982 = vadd.f32 %v906, %v979
    %v983 = vxor.u32 %v982, 2147483648
    %v984 = vmul.f32 %v983, 1.442695
    %v985 = vpow.pop %v984
    %v986 = vadd.f32 %v985, 1.0
    %v987 = vrcp.pop %v986
    %v988 = vmul.f32 1.0, %v987
    %v989 = vtanh.pop %v982
    %v990 = vmul.f32 %v988, %v898
    %992 = vrot.lane.b32.xlu0 %v989, 64
    %v993 = vpop.permute.xlu0 %992
    %v995 = vmul.f32 %v988, %v993
    %997 = vrot.lane.b32.xlu0 %v995, 32
    %v998 = vpop.permute.xlu0 %997
    %v1000 = vadd.f32 %v990, %v998
    %v1001 = vtanh.pop %v1000
    %1003 = vrot.lane.b32.xlu0 %v1001, 64
    %v1004 = vpop.permute.xlu0 %1003
    %v1006 = vmul.f32 %v988, %v1004
    %v1007 = vld [vmem:[%s5] sm:$0xff]
    %v1008 = vld [vmem:[%s5 + $0x8] sm:$0xff]
    %v1009 = vld [vmem:[%s5 + $0x10] sm:$0xff]
    %v1010 = vld [vmem:[%s5 + $0x18] sm:$0xff]
    %1012 = vrot.lane.b32.xlu0 %v1006, 32
    %v1013 = vpop.permute.xlu0 %1012
    %v1014 = vsel %vm106, %v1013, 0
    %1016 = vmatprep.subr.mxu0 0.0
    %1017 = vmatpush1.msra.mxu0 %v1007
    %1018 = vmatprep.subr.mxu0 0.0
    %1019 = vmatpush1.msra.mxu0 %v1008
    %1020 = vmatprep.subr.mxu0 0.0
    %1021 = vmatpush1.msra.mxu0 %v1009
    %1022 = vmatprep.subr.mxu0 0.0
    %1023 = vmatpush1.msra.mxu0 %v1010
    %1024 = vmatprep.subr.mxu0 0.0
    %1025 = vmatpush1.msra.mxu0 0.0
    %1026 = vmatprep.subr.mxu0 0.0
    %1027 = vmatpush1.msra.mxu0 0.0
    %1028 = vmatprep.subr.mxu0 0.0
    %1029 = vmatpush1.msra.mxu0 0.0
    %1030 = vmatprep.subr.mxu0 0.0
    %1031 = vmatpush1.msra.mxu0 0.0
    %1032 = vmatprep.subr.mxu0 0.0
    %1033 = vmatpush1.msra.mxu0 0.0
    %1034 = vmatprep.subr.mxu0 0.0
    %1035 = vmatpush1.msra.mxu0 0.0
    %1036 = vmatprep.subr.mxu0 0.0
    %1037 = vmatpush1.msra.mxu0 0.0
    %1038 = vmatprep.subr.mxu0 0.0
    %1039 = vmatpush1.msra.mxu0 0.0
    %1040 = vmatprep.subr.mxu0 0.0
    %1041 = vmatpush1.msra.mxu0 0.0
    %1042 = vmatprep.subr.mxu0 0.0
    %1043 = vmatpush1.msra.mxu0 0.0
    %1044 = vmatprep.subr.mxu0 0.0
    %1045 = vmatpush1.msra.mxu0 0.0
    %1046 = vmatprep.subr.mxu0 0.0
    %1047 = vmatpush1.msra.mxu0 0.0
    %1048 = vmatprep.subr.mxu0 0.0
    %1049 = vmatpush1.msra.mxu0 0.0
    %1050 = vmatprep.subr.mxu0 0.0
    %1051 = vmatpush1.msra.mxu0 0.0
    %1052 = vmatprep.subr.mxu0 0.0
    %1053 = vmatpush1.msra.mxu0 0.0
    %1054 = vmatprep.subr.mxu0 0.0
    %1055 = vmatpush1.msra.mxu0 0.0
    %1056 = vmatprep.subr.mxu0 0.0
    %1057 = vmatpush1.msra.mxu0 0.0
    %1058 = vmatprep.subr.mxu0 0.0
    %1059 = vmatpush1.msra.mxu0 0.0
    %1060 = vmatprep.subr.mxu0 0.0
    %1061 = vmatpush1.msra.mxu0 0.0
    %1062 = vmatprep.subr.mxu0 0.0
    %1063 = vmatpush1.msra.mxu0 0.0
    %1064 = vmatprep.subr.mxu0 0.0
    %1065 = vmatpush1.msra.mxu0 0.0
    %1066 = vmatprep.subr.mxu0 0.0
    %1067 = vmatpush1.msra.mxu0 0.0
    %1068 = vmatprep.subr.mxu0 0.0
    %1069 = vmatpush1.msra.mxu0 0.0
    %1070 = vmatprep.subr.mxu0 0.0
    %1071 = vmatpush1.msra.mxu0 0.0
    %1072 = vmatprep.subr.mxu0 0.0
    %1073 = vmatpush1.msra.mxu0 0.0
    %1074 = vmatprep.subr.mxu0 0.0
    %1075 = vmatpush1.msra.mxu0 0.0
    %1076 = vmatprep.subr.mxu0 0.0
    %1077 = vmatpush1.msra.mxu0 0.0
    %1078 = vmatprep.subr.mxu0 0.0
    %1079 = vmatpush1.msra.mxu0 0.0
    %1080 = vmatprep.mubr.f32.mxu0 0.0
    %1081 = vmatmul.mubr.f32.gmra.mrb[0].mxu0 %v1014
    %v1082 = vpop.f32.mrb[0].mxu0
    %v1083 = vadd.f32 0.0, %v1082
    %v1084 = vpop.f32.mrb[0].mxu0
    %1085 = vdwg.mxu0
    %vm1086 = vcmask 25600
    %1087 = vst.msk [vmem:[#allocation6] sm:$0x3] %vm1086, %v1083
    // Predicated region
    $region22: #{tpu_custom_call.1} parent=1 // pred_check
      _
    $region23: #{tpu_custom_call.1} parent=1 // pred_check_branch
      %1089 = sbr.rel (0) target = $region25
    $region24: #{tpu_custom_call.1} parent=1 // pred_region
      %s1091 = ssub.s32 32, 32
      %1092 = vsyncadd [#allocation7], %s1091
      %s1094 = sshll.u32 [#allocation6], 4
      %s1095 = int_to_ptr.vmem [resolvable:$true] %s1094
      %1097 = dma.vmem_to_hbm [thread:$0]  %s1095, 32, %s6, [#allocation7]
    $region25: #{tpu_custom_call.1} parent=1 // pred_fallthru
      _
    // Predicated region
    $region26: #{tpu_custom_call.1} parent=1 // pred_check
      _
    $region27: #{tpu_custom_call.1} parent=1 // pred_check_branch
      %1099 = sbr.rel (0) target = $region29
    $region28: #{tpu_custom_call.1} parent=1 // pred_region
      %1100 = dma.done [#allocation7], 32
    $region29: #{tpu_custom_call.1} parent=1 // pred_fallthru
      _
    %1101 = vsyncpa [#allocation7], 1

</llo_original>
